<compile_context>
chip_gen: v6e
topology: v6e:2x2x1
jax: 0.10.0
libtpu: 0.0.40
codegen_flags: <defaults>
</compile_context>

<pallas_src>
import functools

import jax
import jax.numpy as jnp
import numpy as np
from jax.experimental import pallas as pl
from jax.experimental.pallas import tpu as pltpu

STATE_DIM = 128
DETER_DIM = 256
HIDDEN = 256
OBS_SHAPE = 2        # MountainCarContinuous-v0 observation dim
OUT_PAD = 128        # lane-dense padded output width (multiple of 128)
TB_CAP = 512         # max batch tile (mem-bound: big tiles amortize DMA + step overhead)


def _round_up(x, m):
    return ((x + m - 1) // m) * m


def _default_bf16_epilogue():
    """bf16 bias/ReLU epilogue on chips with a native bf16 VPU (v6e / v7x)."""
    try:
        kind = jax.devices()[0].device_kind.lower()
    except Exception:
        return False
    return ("v6" in kind) or ("v7" in kind) or ("7x" in kind)


def _decoder_kernel(state_ref, deter_ref,
                    w1s_ref, w1d_ref, b1_ref,
                    w2_ref, b2_ref,
                    w3_ref, b3_ref,
                    out_ref, *, bf16_epilogue):
    bf = jnp.bfloat16
    s = state_ref[...].astype(bf)
    d = deter_ref[...].astype(bf)

    # Layer 1 as two MXU dots (replaces the lane-axis concat); f32 accumulation.
    acc1 = (jnp.dot(s, w1s_ref[...], preferred_element_type=jnp.float32)
            + jnp.dot(d, w1d_ref[...], preferred_element_type=jnp.float32))

    if bf16_epilogue:
        # v6e / v7x: bias-add + ReLU in bf16 (native bf16 VPU); halves VALU work
        # and removes the separate inter-layer casts.
        h1 = jnp.maximum(acc1.astype(bf) + b1_ref[...].astype(bf), 0)
        acc2 = jnp.dot(h1, w2_ref[...], preferred_element_type=jnp.float32)
        h2 = jnp.maximum(acc2.astype(bf) + b2_ref[...].astype(bf), 0)
        out = jnp.dot(h2, w3_ref[...], preferred_element_type=jnp.float32) + b3_ref[...]
    else:
        # v5e-safe path: epilogue stays in f32.
        h1 = jnp.maximum(acc1 + b1_ref[...], 0.0)
        acc2 = jnp.dot(h1.astype(bf), w2_ref[...], preferred_element_type=jnp.float32)
        h2 = jnp.maximum(acc2 + b2_ref[...], 0.0)
        out = jnp.dot(h2.astype(bf), w3_ref[...], preferred_element_type=jnp.float32) + b3_ref[...]

    out_ref[...] = out.astype(out_ref.dtype)        # (TB, 128) lane-dense store


def init_params(key):
    """f32 params mimicking nn.Linear's uniform(-1/sqrt(fan_in), 1/sqrt(fan_in))."""
    def linear(key, fan_in, fan_out):
        kw, kb = jax.random.split(key)
        bound = 1.0 / jnp.sqrt(fan_in)
        w = jax.random.uniform(kw, (fan_in, fan_out), jnp.float32, -bound, bound)
        b = jax.random.uniform(kb, (1, fan_out), jnp.float32, -bound, bound)
        return w, b

    k1, k2, k3 = jax.random.split(key, 3)
    w1, b1 = linear(k1, STATE_DIM + DETER_DIM, HIDDEN)
    w2, b2 = linear(k2, HIDDEN, HIDDEN)
    w3, b3 = linear(k3, HIDDEN, OBS_SHAPE)
    return (w1, b1, w2, b2, w3, b3)


def prepare_params(params):
    """Split W1, cast weights to bf16, zero-pad layer 3 to a lane-dense 128-wide output."""
    w1, b1, w2, b2, w3, b3 = params
    w1s = w1[:STATE_DIM, :].astype(jnp.bfloat16)                          # (128, 256)
    w1d = w1[STATE_DIM:, :].astype(jnp.bfloat16)                          # (256, 256)
    w3p = jnp.zeros((HIDDEN, OUT_PAD), jnp.float32).at[:, :OBS_SHAPE].set(w3)
    b3p = jnp.zeros((1, OUT_PAD), jnp.float32).at[:, :OBS_SHAPE].set(b3)  # zero pad lanes
    return (w1s, w1d, b1.astype(jnp.float32),
            w2.astype(jnp.bfloat16), b2.astype(jnp.float32),
            w3p.astype(jnp.bfloat16), b3p)


def _choose_tiling(B, row_align):
    """Batch tile + grid length.  Even grid so v7x megacore halves stay balanced."""
    if B <= 2 * row_align:
        # Tiny batch (Dreamer B=2 path): one tile, one sublane group.
        tb = _round_up(max(B, row_align), row_align)
        return tb, 1
    grid_n = max(2, pl.cdiv(B, TB_CAP))
    if grid_n % 2:
        grid_n += 1
    tb = _round_up(pl.cdiv(B, grid_n), row_align)
    return tb, grid_n


def decoder_forward(state, deter, prepped, *, bf16_epilogue=None, out_dtype=jnp.float32):
    """state: (B, 128), deter: (B, 256)  (f32 or bf16)  ->  (B, OBS_SHAPE) out_dtype."""
    w1s, w1d, b1, w2, b2, w3p, b3p = prepped
    B = state.shape[0]
    if bf16_epilogue is None:
        bf16_epilogue = _default_bf16_epilogue()

    # Batch tiling: row alignment 8 for f32 inputs, 16 if inputs arrive as bf16.
    row_align = 16 if (state.dtype == jnp.bfloat16 or deter.dtype == jnp.bfloat16) else 8
    TB, grid_n = _choose_tiling(B, row_align)
    B_pad = grid_n * TB
    if B_pad != B:
        pad = ((0, B_pad - B), (0, 0))
        state = jnp.pad(state, pad)
        deter = jnp.pad(deter, pad)

    flops = 2 * B_pad * (STATE_DIM * HIDDEN + DETER_DIM * HIDDEN
                         + HIDDEN * HIDDEN + HIDDEN * OUT_PAD)
    bytes_accessed = (
        state.size * state.dtype.itemsize + deter.size * deter.dtype.itemsize
        + B_pad * OUT_PAD * np.dtype(out_dtype).itemsize
        + (w1s.size + w1d.size + w2.size + w3p.size) * 2
        + (b1.size + b2.size + b3p.size) * 4)

    kernel = functools.partial(_decoder_kernel, bf16_epilogue=bf16_epilogue)

    def _run(weight_mode):
        def wspec(shape):
            if weight_mode is None:
                return pl.BlockSpec(shape, lambda i: (0, 0))
            return pl.BlockSpec(shape, lambda i: (0, 0), pipeline_mode=weight_mode)

        return pl.pallas_call(
            kernel,
            out_shape=jax.ShapeDtypeStruct((B_pad, OUT_PAD), out_dtype),
            grid=(grid_n,),
            in_specs=[
                pl.BlockSpec((TB, STATE_DIM), lambda i: (i, 0)),
                pl.BlockSpec((TB, DETER_DIM), lambda i: (i, 0)),
                wspec((STATE_DIM, HIDDEN)),
                wspec((DETER_DIM, HIDDEN)),
                wspec((1, HIDDEN)),
                wspec((HIDDEN, HIDDEN)),
                wspec((1, HIDDEN)),
                wspec((HIDDEN, OUT_PAD)),
                wspec((1, OUT_PAD)),
            ],
            out_specs=pl.BlockSpec((TB, OUT_PAD), lambda i: (i, 0)),
            compiler_params=pltpu.CompilerParams(
                dimension_semantics=("parallel",)),   # v7x: batch tiles across both TCs
            cost_estimate=pl.CostEstimate(
                flops=flops, transcendentals=0, bytes_accessed=bytes_accessed),
        )(state, deter, w1s, w1d, b1, w2, b2, w3p, b3p)

    try:
        # Constant-index weight/bias blocks: single-buffered, VMEM-resident across tiles.
        out = _run(pl.Buffered(1))
    except Exception:
        # Fallback for Pallas versions that reject single buffering on these specs.
        out = _run(None)

    return out[:B, :OBS_SHAPE]


def reference_forward(state, deter, params):
    """Pure-f32 reference matching the PyTorch module semantics."""
    w1, b1, w2, b2, w3, b3 = params
    x = jnp.concatenate([state, deter], axis=-1)
    h1 = jnp.maximum(x @ w1 + b1, 0.0)
    h2 = jnp.maximum(h1 @ w2 + b2, 0.0)
    return h2 @ w3 + b3


def reference_forward_bf16(state, deter, params, *, bf16_epilogue=False):
    """Reference mirroring the kernel's exact precision path."""
    w1, b1, w2, b2, w3, b3 = params
    bf = jnp.bfloat16
    acc1 = (jnp.dot(state.astype(bf), w1[:STATE_DIM].astype(bf),
                    preferred_element_type=jnp.float32)
            + jnp.dot(deter.astype(bf), w1[STATE_DIM:].astype(bf),
                      preferred_element_type=jnp.float32))
    if bf16_epilogue:
        h1 = jnp.maximum(acc1.astype(bf) + b1.astype(bf), 0)
        acc2 = jnp.dot(h1, w2.astype(bf), preferred_element_type=jnp.float32)
        h2 = jnp.maximum(acc2.astype(bf) + b2.astype(bf), 0)
        return jnp.dot(h2, w3.astype(bf), preferred_element_type=jnp.float32) + b3
    h1 = jnp.maximum(acc1 + b1, 0.0)
    acc2 = jnp.dot(h1.astype(bf), w2.astype(bf), preferred_element_type=jnp.float32)
    h2 = jnp.maximum(acc2 + b2, 0.0)
    return jnp.dot(h2.astype(bf), w3.astype(bf), preferred_element_type=jnp.float32) + b3


if __name__ == "__main__":
    key = jax.random.PRNGKey(0)
    kp, ks, kd = jax.random.split(key, 3)

    params = init_params(kp)
    prepped = prepare_params(params)
    bf16_epi = _default_bf16_epilogue()

    # Dreamer-style tiny batch (B=2), matching how Decoder_ is called in the spec.
    B = 2
    state = jax.random.normal(ks, (B, STATE_DIM), jnp.float32)
    deter = jax.random.normal(kd, (B, DETER_DIM), jnp.float32)

    out = decoder_forward(state, deter, prepped, bf16_epilogue=bf16_epi)
    out = jax.block_until_ready(out)
    assert out.shape == (B, OBS_SHAPE), out.shape

    ref_bf16 = reference_forward_bf16(state, deter, params, bf16_epilogue=bf16_epi)
    ref_f32 = reference_forward(state, deter, params)
    assert jnp.allclose(out, ref_bf16, atol=2e-3, rtol=2e-3), "mismatch vs bf16 reference"
    assert jnp.allclose(out, ref_f32, atol=3e-2, rtol=3e-2), "mismatch vs f32 reference"

    # Larger batch: exercises the even multi-step grid + batch padding path.
    B2 = 200
    ks2, kd2 = jax.random.split(jax.random.PRNGKey(1))
    state2 = jax.random.normal(ks2, (B2, STATE_DIM), jnp.float32)
    deter2 = jax.random.normal(kd2, (B2, DETER_DIM), jnp.float32)
    out2 = jax.block_until_ready(
        decoder_forward(state2, deter2, prepped, bf16_epilogue=bf16_epi))
    assert out2.shape == (B2, OBS_SHAPE), out2.shape
    ref2 = reference_forward_bf16(state2, deter2, params, bf16_epilogue=bf16_epi)
    assert jnp.allclose(out2, ref2, atol=2e-3, rtol=2e-3), "mismatch (large batch)"

    print("KERNEL_OK")
</pallas_src>

<mosaic_0001>
module attributes {stable_mosaic.version = 11 : i64} {
  func.func @_decoder_kernel(%arg0: i32, %arg1: memref<8x128xf32, #tpu.memory_space<vmem>>, %arg2: memref<8x256xf32, #tpu.memory_space<vmem>>, %arg3: memref<128x256xbf16, #tpu.memory_space<vmem>>, %arg4: memref<256x256xbf16, #tpu.memory_space<vmem>>, %arg5: memref<1x256xf32, #tpu.memory_space<vmem>>, %arg6: memref<256x256xbf16, #tpu.memory_space<vmem>>, %arg7: memref<1x256xf32, #tpu.memory_space<vmem>>, %arg8: memref<256x128xbf16, #tpu.memory_space<vmem>>, %arg9: memref<1x128xf32, #tpu.memory_space<vmem>>, %arg10: memref<8x128xf32, #tpu.memory_space<vmem>>) attributes {dimension_semantics = [#tpu.dimension_semantics<parallel>], iteration_bounds = array<i64: 1>, scalar_prefetch = 0 : i64, scratch_operands = 0 : i64, tpu.core_type = #tpu.core_type<tc>, window_params = [{transform_indices = @transform_0, window_bounds = array<i64: 8, 128>}, {transform_indices = @transform_1, window_bounds = array<i64: 8, 256>}, {pipeline_mode = #tpu.pipeline_mode<synchronous>, transform_indices = @transform_2, window_bounds = array<i64: 128, 256>}, {pipeline_mode = #tpu.pipeline_mode<synchronous>, transform_indices = @transform_3, window_bounds = array<i64: 256, 256>}, {pipeline_mode = #tpu.pipeline_mode<synchronous>, transform_indices = @transform_4, window_bounds = array<i64: 1, 256>}, {pipeline_mode = #tpu.pipeline_mode<synchronous>, transform_indices = @transform_5, window_bounds = array<i64: 256, 256>}, {pipeline_mode = #tpu.pipeline_mode<synchronous>, transform_indices = @transform_6, window_bounds = array<i64: 1, 256>}, {pipeline_mode = #tpu.pipeline_mode<synchronous>, transform_indices = @transform_7, window_bounds = array<i64: 256, 128>}, {pipeline_mode = #tpu.pipeline_mode<synchronous>, transform_indices = @transform_8, window_bounds = array<i64: 1, 128>}, {transform_indices = @transform_9, window_bounds = array<i64: 8, 128>}]} {
    %c0 = arith.constant 0 : index
    %c0_0 = arith.constant 0 : index
    %0 = vector.load %arg1[%c0, %c0_0] : memref<8x128xf32, #tpu.memory_space<vmem>>, vector<8x128xf32>
    %1 = arith.truncf %0 : vector<8x128xf32> to vector<8x128xbf16>
    %c0_1 = arith.constant 0 : index
    %c0_2 = arith.constant 0 : index
    %2 = vector.load %arg2[%c0_1, %c0_2] : memref<8x256xf32, #tpu.memory_space<vmem>>, vector<8x256xf32>
    %3 = arith.truncf %2 : vector<8x256xf32> to vector<8x256xbf16>
    %c0_3 = arith.constant 0 : index
    %c0_4 = arith.constant 0 : index
    %4 = vector.load %arg3[%c0_3, %c0_4] : memref<128x256xbf16, #tpu.memory_space<vmem>>, vector<128x256xbf16>
    %cst = arith.constant dense<0.000000e+00> : vector<8x256xf32>
    %5 = tpu.matmul %1, %4, %cst {dimension_numbers = #tpu.dot_dimension_numbers<[1], [0], [0], [1], [0, 0, 1, 1], [], []>} : vector<8x128xbf16>, vector<128x256xbf16>, vector<8x256xf32> -> vector<8x256xf32>
    %c0_5 = arith.constant 0 : index
    %c0_6 = arith.constant 0 : index
    %6 = vector.load %arg4[%c0_5, %c0_6] : memref<256x256xbf16, #tpu.memory_space<vmem>>, vector<256x256xbf16>
    %cst_7 = arith.constant dense<0.000000e+00> : vector<8x256xf32>
    %7 = tpu.matmul %3, %6, %cst_7 {dimension_numbers = #tpu.dot_dimension_numbers<[1], [0], [0], [1], [0, 0, 1, 1], [], []>} : vector<8x256xbf16>, vector<256x256xbf16>, vector<8x256xf32> -> vector<8x256xf32>
    %8 = arith.addf %5, %7 : vector<8x256xf32>
    %c0_8 = arith.constant 0 : index
    %c0_9 = arith.constant 0 : index
    %9 = vector.load %arg5[%c0_8, %c0_9] : memref<1x256xf32, #tpu.memory_space<vmem>>, vector<1x256xf32>
    %10 = vector.broadcast %9 : vector<1x256xf32> to vector<8x256xf32>
    %11 = arith.addf %8, %10 : vector<8x256xf32>
    %cst_10 = arith.constant 0.000000e+00 : f32
    %12 = vector.broadcast %cst_10 : f32 to vector<8x256xf32>
    %13 = arith.maximumf %11, %12 : vector<8x256xf32>
    %14 = arith.truncf %13 : vector<8x256xf32> to vector<8x256xbf16>
    %c0_11 = arith.constant 0 : index
    %c0_12 = arith.constant 0 : index
    %15 = vector.load %arg6[%c0_11, %c0_12] : memref<256x256xbf16, #tpu.memory_space<vmem>>, vector<256x256xbf16>
    %cst_13 = arith.constant dense<0.000000e+00> : vector<8x256xf32>
    %16 = tpu.matmul %14, %15, %cst_13 {dimension_numbers = #tpu.dot_dimension_numbers<[1], [0], [0], [1], [0, 0, 1, 1], [], []>} : vector<8x256xbf16>, vector<256x256xbf16>, vector<8x256xf32> -> vector<8x256xf32>
    %c0_14 = arith.constant 0 : index
    %c0_15 = arith.constant 0 : index
    %17 = vector.load %arg7[%c0_14, %c0_15] : memref<1x256xf32, #tpu.memory_space<vmem>>, vector<1x256xf32>
    %18 = vector.broadcast %17 : vector<1x256xf32> to vector<8x256xf32>
    %19 = arith.addf %16, %18 : vector<8x256xf32>
    %cst_16 = arith.constant 0.000000e+00 : f32
    %20 = vector.broadcast %cst_16 : f32 to vector<8x256xf32>
    %21 = arith.maximumf %19, %20 : vector<8x256xf32>
    %22 = arith.truncf %21 : vector<8x256xf32> to vector<8x256xbf16>
    %c0_17 = arith.constant 0 : index
    %c0_18 = arith.constant 0 : index
    %23 = vector.load %arg8[%c0_17, %c0_18] : memref<256x128xbf16, #tpu.memory_space<vmem>>, vector<256x128xbf16>
    %cst_19 = arith.constant dense<0.000000e+00> : vector<8x128xf32>
    %24 = tpu.matmul %22, %23, %cst_19 {dimension_numbers = #tpu.dot_dimension_numbers<[1], [0], [0], [1], [0, 0, 1, 1], [], []>} : vector<8x256xbf16>, vector<256x128xbf16>, vector<8x128xf32> -> vector<8x128xf32>
    %c0_20 = arith.constant 0 : index
    %c0_21 = arith.constant 0 : index
    %25 = vector.load %arg9[%c0_20, %c0_21] : memref<1x128xf32, #tpu.memory_space<vmem>>, vector<1x128xf32>
    %26 = vector.broadcast %25 : vector<1x128xf32> to vector<8x128xf32>
    %27 = arith.addf %24, %26 : vector<8x128xf32>
    %c0_22 = arith.constant 0 : index
    %c0_23 = arith.constant 0 : index
    %28 = vector.load %arg10[%c0_22, %c0_23] : memref<8x128xf32, #tpu.memory_space<vmem>>, vector<8x128xf32>
    tpu.vector_store %arg10[%c0_22, %c0_23], %27 {strides = array<i32>} : memref<8x128xf32, #tpu.memory_space<vmem>>, vector<8x128xf32>,
    return
  }
  func.func @transform_0(%arg0: i32) -> (i32, i32) {
    %c0_i32 = arith.constant 0 : i32
    %c0_i32_0 = arith.constant 0 : i32
    return %arg0, %c0_i32 : i32, i32
  }
  func.func @transform_1(%arg0: i32) -> (i32, i32) {
    %c0_i32 = arith.constant 0 : i32
    %c0_i32_0 = arith.constant 0 : i32
    return %arg0, %c0_i32 : i32, i32
  }
  func.func @transform_2(%arg0: i32) -> (i32, i32) {
    %c0_i32 = arith.constant 0 : i32
    %c0_i32_0 = arith.constant 0 : i32
    %c0_i32_1 = arith.constant 0 : i32
    return %c0_i32, %c0_i32_0 : i32, i32
  }
  func.func @transform_3(%arg0: i32) -> (i32, i32) {
    %c0_i32 = arith.constant 0 : i32
    %c0_i32_0 = arith.constant 0 : i32
    %c0_i32_1 = arith.constant 0 : i32
    return %c0_i32, %c0_i32_0 : i32, i32
  }
  func.func @transform_4(%arg0: i32) -> (i32, i32) {
    %c0_i32 = arith.constant 0 : i32
    %c0_i32_0 = arith.constant 0 : i32
    %c0_i32_1 = arith.constant 0 : i32
    return %c0_i32, %c0_i32_0 : i32, i32
  }
  func.func @transform_5(%arg0: i32) -> (i32, i32) {
    %c0_i32 = arith.constant 0 : i32
    %c0_i32_0 = arith.constant 0 : i32
    %c0_i32_1 = arith.constant 0 : i32
    return %c0_i32, %c0_i32_0 : i32, i32
  }
  func.func @transform_6(%arg0: i32) -> (i32, i32) {
    %c0_i32 = arith.constant 0 : i32
    %c0_i32_0 = arith.constant 0 : i32
    %c0_i32_1 = arith.constant 0 : i32
    return %c0_i32, %c0_i32_0 : i32, i32
  }
  func.func @transform_7(%arg0: i32) -> (i32, i32) {
    %c0_i32 = arith.constant 0 : i32
    %c0_i32_0 = arith.constant 0 : i32
    %c0_i32_1 = arith.constant 0 : i32
    return %c0_i32, %c0_i32_0 : i32, i32
  }
  func.func @transform_8(%arg0: i32) -> (i32, i32) {
    %c0_i32 = arith.constant 0 : i32
    %c0_i32_0 = arith.constant 0 : i32
    %c0_i32_1 = arith.constant 0 : i32
    return %c0_i32, %c0_i32_0 : i32, i32
  }
  func.func @transform_9(%arg0: i32) -> (i32, i32) {
    %c0_i32 = arith.constant 0 : i32
    %c0_i32_0 = arith.constant 0 : i32
    return %arg0, %c0_i32 : i32, i32
  }
}

module attributes {stable_mosaic.version = 11 : i64} {
  func.func @_decoder_kernel(%arg0: i32, %arg1: memref<8x128xf32, #tpu.memory_space<vmem>>, %arg2: memref<8x256xf32, #tpu.memory_space<vmem>>, %arg3: memref<128x256xbf16, #tpu.memory_space<vmem>>, %arg4: memref<256x256xbf16, #tpu.memory_space<vmem>>, %arg5: memref<1x256xf32, #tpu.memory_space<vmem>>, %arg6: memref<256x256xbf16, #tpu.memory_space<vmem>>, %arg7: memref<1x256xf32, #tpu.memory_space<vmem>>, %arg8: memref<256x128xbf16, #tpu.memory_space<vmem>>, %arg9: memref<1x128xf32, #tpu.memory_space<vmem>>, %arg10: memref<8x128xf32, #tpu.memory_space<vmem>>) attributes {dimension_semantics = [#tpu.dimension_semantics<parallel>], iteration_bounds = array<i64: 1>, scalar_prefetch = 0 : i64, scratch_operands = 0 : i64, tpu.core_type = #tpu.core_type<tc>, window_params = [{transform_indices = @transform_0, window_bounds = array<i64: 8, 128>}, {transform_indices = @transform_1, window_bounds = array<i64: 8, 256>}, {pipeline_mode = #tpu.pipeline_mode<synchronous>, transform_indices = @transform_2, window_bounds = array<i64: 128, 256>}, {pipeline_mode = #tpu.pipeline_mode<synchronous>, transform_indices = @transform_3, window_bounds = array<i64: 256, 256>}, {pipeline_mode = #tpu.pipeline_mode<synchronous>, transform_indices = @transform_4, window_bounds = array<i64: 1, 256>}, {pipeline_mode = #tpu.pipeline_mode<synchronous>, transform_indices = @transform_5, window_bounds = array<i64: 256, 256>}, {pipeline_mode = #tpu.pipeline_mode<synchronous>, transform_indices = @transform_6, window_bounds = array<i64: 1, 256>}, {pipeline_mode = #tpu.pipeline_mode<synchronous>, transform_indices = @transform_7, window_bounds = array<i64: 256, 128>}, {pipeline_mode = #tpu.pipeline_mode<synchronous>, transform_indices = @transform_8, window_bounds = array<i64: 1, 128>}, {transform_indices = @transform_9, window_bounds = array<i64: 8, 128>}]} {
    %c0 = arith.constant 0 : index
    %c0_0 = arith.constant 0 : index
    %0 = vector.load %arg1[%c0, %c0_0] : memref<8x128xf32, #tpu.memory_space<vmem>>, vector<8x128xf32>
    %1 = arith.truncf %0 : vector<8x128xf32> to vector<8x128xbf16>
    %c0_1 = arith.constant 0 : index
    %c0_2 = arith.constant 0 : index
    %2 = vector.load %arg2[%c0_1, %c0_2] : memref<8x256xf32, #tpu.memory_space<vmem>>, vector<8x256xf32>
    %3 = arith.truncf %2 : vector<8x256xf32> to vector<8x256xbf16>
    %c0_3 = arith.constant 0 : index
    %c0_4 = arith.constant 0 : index
    %4 = vector.load %arg3[%c0_3, %c0_4] : memref<128x256xbf16, #tpu.memory_space<vmem>>, vector<128x256xbf16>
    %cst = arith.constant dense<0.000000e+00> : vector<8x256xf32>
    %5 = tpu.matmul %1, %4, %cst {dimension_numbers = #tpu.dot_dimension_numbers<[1], [0], [0], [1], [0, 0, 1, 1], [], []>} : vector<8x128xbf16>, vector<128x256xbf16>, vector<8x256xf32> -> vector<8x256xf32>
    %c0_5 = arith.constant 0 : index
    %c0_6 = arith.constant 0 : index
    %6 = vector.load %arg4[%c0_5, %c0_6] : memref<256x256xbf16, #tpu.memory_space<vmem>>, vector<256x256xbf16>
    %cst_7 = arith.constant dense<0.000000e+00> : vector<8x256xf32>
    %7 = tpu.matmul %3, %6, %cst_7 {dimension_numbers = #tpu.dot_dimension_numbers<[1], [0], [0], [1], [0, 0, 1, 1], [], []>} : vector<8x256xbf16>, vector<256x256xbf16>, vector<8x256xf32> -> vector<8x256xf32>
    %8 = arith.addf %5, %7 : vector<8x256xf32>
    %c0_8 = arith.constant 0 : index
    %c0_9 = arith.constant 0 : index
    %9 = vector.load %arg5[%c0_8, %c0_9] : memref<1x256xf32, #tpu.memory_space<vmem>>, vector<1x256xf32>
    %10 = vector.broadcast %9 : vector<1x256xf32> to vector<8x256xf32>
    %11 = arith.addf %8, %10 : vector<8x256xf32>
    %cst_10 = arith.constant 0.000000e+00 : f32
    %12 = vector.broadcast %cst_10 : f32 to vector<8x256xf32>
    %13 = arith.maximumf %11, %12 : vector<8x256xf32>
    %14 = arith.truncf %13 : vector<8x256xf32> to vector<8x256xbf16>
    %c0_11 = arith.constant 0 : index
    %c0_12 = arith.constant 0 : index
    %15 = vector.load %arg6[%c0_11, %c0_12] : memref<256x256xbf16, #tpu.memory_space<vmem>>, vector<256x256xbf16>
    %cst_13 = arith.constant dense<0.000000e+00> : vector<8x256xf32>
    %16 = tpu.matmul %14, %15, %cst_13 {dimension_numbers = #tpu.dot_dimension_numbers<[1], [0], [0], [1], [0, 0, 1, 1], [], []>} : vector<8x256xbf16>, vector<256x256xbf16>, vector<8x256xf32> -> vector<8x256xf32>
    %c0_14 = arith.constant 0 : index
    %c0_15 = arith.constant 0 : index
    %17 = vector.load %arg7[%c0_14, %c0_15] : memref<1x256xf32, #tpu.memory_space<vmem>>, vector<1x256xf32>
    %18 = vector.broadcast %17 : vector<1x256xf32> to vector<8x256xf32>
    %19 = arith.addf %16, %18 : vector<8x256xf32>
    %cst_16 = arith.constant 0.000000e+00 : f32
    %20 = vector.broadcast %cst_16 : f32 to vector<8x256xf32>
    %21 = arith.maximumf %19, %20 : vector<8x256xf32>
    %22 = arith.truncf %21 : vector<8x256xf32> to vector<8x256xbf16>
    %c0_17 = arith.constant 0 : index
    %c0_18 = arith.constant 0 : index
    %23 = vector.load %arg8[%c0_17, %c0_18] : memref<256x128xbf16, #tpu.memory_space<vmem>>, vector<256x128xbf16>
    %cst_19 = arith.constant dense<0.000000e+00> : vector<8x128xf32>
    %24 = tpu.matmul %22, %23, %cst_19 {dimension_numbers = #tpu.dot_dimension_numbers<[1], [0], [0], [1], [0, 0, 1, 1], [], []>} : vector<8x256xbf16>, vector<256x128xbf16>, vector<8x128xf32> -> vector<8x128xf32>
    %c0_20 = arith.constant 0 : index
    %c0_21 = arith.constant 0 : index
    %25 = vector.load %arg9[%c0_20, %c0_21] : memref<1x128xf32, #tpu.memory_space<vmem>>, vector<1x128xf32>
    %26 = vector.broadcast %25 : vector<1x128xf32> to vector<8x128xf32>
    %27 = arith.addf %24, %26 : vector<8x128xf32>
    %c0_22 = arith.constant 0 : index
    %c0_23 = arith.constant 0 : index
    %28 = vector.load %arg10[%c0_22, %c0_23] : memref<8x128xf32, #tpu.memory_space<vmem>>, vector<8x128xf32>
    tpu.vector_store %arg10[%c0_22, %c0_23], %27 {strides = array<i32>} : memref<8x128xf32, #tpu.memory_space<vmem>>, vector<8x128xf32>,
    return
  }
  func.func @transform_0(%arg0: i32) -> (i32, i32) {
    %c0_i32 = arith.constant 0 : i32
    %c0_i32_0 = arith.constant 0 : i32
    return %arg0, %c0_i32 : i32, i32
  }
  func.func @transform_1(%arg0: i32) -> (i32, i32) {
    %c0_i32 = arith.constant 0 : i32
    %c0_i32_0 = arith.constant 0 : i32
    return %arg0, %c0_i32 : i32, i32
  }
  func.func @transform_2(%arg0: i32) -> (i32, i32) {
    %c0_i32 = arith.constant 0 : i32
    %c0_i32_0 = arith.constant 0 : i32
    %c0_i32_1 = arith.constant 0 : i32
    return %c0_i32, %c0_i32_0 : i32, i32
  }
  func.func @transform_3(%arg0: i32) -> (i32, i32) {
    %c0_i32 = arith.constant 0 : i32
    %c0_i32_0 = arith.constant 0 : i32
    %c0_i32_1 = arith.constant 0 : i32
    return %c0_i32, %c0_i32_0 : i32, i32
  }
  func.func @transform_4(%arg0: i32) -> (i32, i32) {
    %c0_i32 = arith.constant 0 : i32
    %c0_i32_0 = arith.constant 0 : i32
    %c0_i32_1 = arith.constant 0 : i32
    return %c0_i32, %c0_i32_0 : i32, i32
  }
  func.func @transform_5(%arg0: i32) -> (i32, i32) {
    %c0_i32 = arith.constant 0 : i32
    %c0_i32_0 = arith.constant 0 : i32
    %c0_i32_1 = arith.constant 0 : i32
    return %c0_i32, %c0_i32_0 : i32, i32
  }
  func.func @transform_6(%arg0: i32) -> (i32, i32) {
    %c0_i32 = arith.constant 0 : i32
    %c0_i32_0 = arith.constant 0 : i32
    %c0_i32_1 = arith.constant 0 : i32
    return %c0_i32, %c0_i32_0 : i32, i32
  }
  func.func @transform_7(%arg0: i32) -> (i32, i32) {
    %c0_i32 = arith.constant 0 : i32
    %c0_i32_0 = arith.constant 0 : i32
    %c0_i32_1 = arith.constant 0 : i32
    return %c0_i32, %c0_i32_0 : i32, i32
  }
  func.func @transform_8(%arg0: i32) -> (i32, i32) {
    %c0_i32 = arith.constant 0 : i32
    %c0_i32_0 = arith.constant 0 : i32
    %c0_i32_1 = arith.constant 0 : i32
    return %c0_i32, %c0_i32_0 : i32, i32
  }
  func.func @transform_9(%arg0: i32) -> (i32, i32) {
    %c0_i32 = arith.constant 0 : i32
    %c0_i32_0 = arith.constant 0 : i32
    return %arg0, %c0_i32 : i32, i32
  }
}

</mosaic_0001>

<llo_original>
// kernel: tpu_custom_call.1
$region0: #{tpu_custom_call.1}
  #allocation0 [shape = 'u32[]', space=smem, size = 0x4, offset = 0x4, fixed_abs, tag = 'smem constant byte address 0x4 - core index']
  #allocation1 [shape = 'u32[144,128]{1,0:T(1,128)}', space=vmem, size = 0x12000, scoped, tag = 'internal scratch']
  %s0 = inlined_call_operand.hbm [shape: f32[8,128], index: 0, kind: input, shape index: {}]
  %s1 = inlined_call_operand.hbm [shape: f32[8,256], index: 1, kind: input, shape index: {}]
  %s2 = inlined_call_operand.hbm [shape: bf16[128,256], index: 2, kind: input, shape index: {}]
  %s3 = inlined_call_operand.hbm [shape: bf16[256,256], index: 3, kind: input, shape index: {}]
  %s4 = inlined_call_operand.vmem [shape: f32[1,256], index: 4, kind: input, shape index: {}]
  %s5 = inlined_call_operand.hbm [shape: bf16[256,256], index: 5, kind: input, shape index: {}]
  %s6 = inlined_call_operand.vmem [shape: f32[1,256], index: 6, kind: input, shape index: {}]
  %s7 = inlined_call_operand.hbm [shape: bf16[256,128], index: 7, kind: input, shape index: {}]
  %s8 = inlined_call_operand.vmem [shape: f32[1,128], index: 8, kind: input, shape index: {}]
  %s9 = inlined_call_operand.hbm [shape: f32[8,128], index: 9, kind: output, shape index: {}]
  %s10 = sld [smem:[#allocation0]]
  $region70: #{tpu_custom_call.1} parent=0
    _
  %s12 = ssub.s32 1, %s10
  %s13 = scalar_select 0, %s12, %s10
  $region1: #{tpu_custom_call.1} parent=0
    #allocation2 [shape = 'u8[4096]{0}', space=vmem, size = 0x1000, scoped, tag = 'input window, operand 0, single buffered']
    #allocation3 [shape = 's32[1]{0}', space=sflag, size = 0x4, scoped, tag = 'scoped memory for tpu_custom_call.1']
    #allocation4 [shape = 's32[1]{0}', space=sflag, size = 0x4, scoped, tag = 'scoped memory for tpu_custom_call.1']
    #allocation5 [shape = 'u8[8192]{0}', space=vmem, size = 0x2000, scoped, tag = 'input window, operand 1, single buffered']
    #allocation6 [shape = 's32[1]{0}', space=sflag, size = 0x4, scoped, tag = 'scoped memory for tpu_custom_call.1']
    #allocation7 [shape = 'u8[65536]{0}', space=vmem, size = 0x10000, scoped, tag = 'input window, operand 2, single buffered']
    #allocation8 [shape = 'u8[131072]{0}', space=vmem, size = 0x20000, scoped, tag = 'input window, operand 3, single buffered']
    #allocation9 [shape = 's32[1]{0}', space=sflag, size = 0x4, scoped, tag = 'scoped memory for tpu_custom_call.1']
    #allocation10 [shape = 'u8[131072]{0}', space=vmem, size = 0x20000, scoped, tag = 'input window, operand 5, single buffered']
    #allocation11 [shape = 'u8[65536]{0}', space=vmem, size = 0x10000, scoped, tag = 'input window, operand 7, single buffered']
    #allocation12 [shape = 's32[1]{0}', space=sflag, size = 0x4, scoped, tag = 'scoped memory for tpu_custom_call.1']
    #allocation13 [shape = 'u8[4096]{0}', space=vmem, size = 0x1000, scoped, tag = 'output window, operand 0, single buffered']
    %14 = vsyncpa [#allocation3], 0
    %15 = vsyncpa [#allocation6], 0
    %16 = vsyncpa [#allocation9], 0
    %17 = vsyncpa [#allocation12], 0
    %18 = vsyncpa [#allocation4], 0
    // Predicated region
    $region2: #{tpu_custom_call.1} parent=1 // pred_check
      _
    $region3: #{tpu_custom_call.1} parent=1 // pred_check_branch
      %20 = sbr.rel (0) target = $region5
    $region4: #{tpu_custom_call.1} parent=1 // pred_region
      %s22 = ssub.s32 128, 128
      %23 = vsyncadd [#allocation3], %s22
      %s25 = sshll.u32 [#allocation2], 4
      %s26 = int_to_ptr.vmem [resolvable:$true] %s25
      %28 = dma.hbm_to_vmem [thread:$0]  %s0, 128, %s26, [#allocation3]
    $region5: #{tpu_custom_call.1} parent=1 // pred_fallthru
      _
    // Predicated region
    $region6: #{tpu_custom_call.1} parent=1 // pred_check
      _
    $region7: #{tpu_custom_call.1} parent=1 // pred_check_branch
      %30 = sbr.rel (0) target = $region9
    $region8: #{tpu_custom_call.1} parent=1 // pred_region
      %s32 = ssub.s32 256, 256
      %33 = vsyncadd [#allocation6], %s32
      %s35 = sshll.u32 [#allocation5], 4
      %s36 = int_to_ptr.vmem [resolvable:$true] %s35
      %38 = dma.hbm_to_vmem [thread:$0]  %s1, 256, %s36, [#allocation6]
    $region9: #{tpu_custom_call.1} parent=1 // pred_fallthru
      _
    // Predicated region
    $region10: #{tpu_custom_call.1} parent=1 // pred_check
      _
    $region11: #{tpu_custom_call.1} parent=1 // pred_check_branch
      %40 = sbr.rel (0) target = $region13
    $region12: #{tpu_custom_call.1} parent=1 // pred_region
      %s42 = ssub.s32 2048, 2048
      %43 = vsyncadd [#allocation6], %s42
      %s44 = sshll.u32 [#allocation7], 4
      %s45 = int_to_ptr.vmem [resolvable:$true] %s44
      %50 = dma.hbm_to_vmem [thread:$0]  %s2, 2048, %s45, [#allocation6], 128, 128, 8
    $region13: #{tpu_custom_call.1} parent=1 // pred_fallthru
      _
    // Predicated region
    $region14: #{tpu_custom_call.1} parent=1 // pred_check
      _
    $region15: #{tpu_custom_call.1} parent=1 // pred_check_branch
      %52 = sbr.rel (0) target = $region17
    $region16: #{tpu_custom_call.1} parent=1 // pred_region
      %s54 = ssub.s32 4096, 4096
      %55 = vsyncadd [#allocation9], %s54
      %s56 = sshll.u32 [#allocation8], 4
      %s57 = int_to_ptr.vmem [resolvable:$true] %s56
      %62 = dma.hbm_to_vmem [thread:$0]  %s3, 4096, %s57, [#allocation9], 128, 128, 8
    $region17: #{tpu_custom_call.1} parent=1 // pred_fallthru
      _
    // Predicated region
    $region18: #{tpu_custom_call.1} parent=1 // pred_check
      _
    $region19: #{tpu_custom_call.1} parent=1 // pred_check_branch
      %64 = sbr.rel (0) target = $region21
    $region20: #{tpu_custom_call.1} parent=1 // pred_region
      _
    $region21: #{tpu_custom_call.1} parent=1 // pred_fallthru
      _
    // Predicated region
    $region22: #{tpu_custom_call.1} parent=1 // pred_check
      _
    $region23: #{tpu_custom_call.1} parent=1 // pred_check_branch
      %66 = sbr.rel (0) target = $region25
    $region24: #{tpu_custom_call.1} parent=1 // pred_region
      %s68 = ssub.s32 4096, 4096
      %69 = vsyncadd [#allocation9], %s68
      %s70 = sshll.u32 [#allocation10], 4
      %s71 = int_to_ptr.vmem [resolvable:$true] %s70
      %76 = dma.hbm_to_vmem [thread:$0]  %s5, 4096, %s71, [#allocation9], 128, 128, 8
    $region25: #{tpu_custom_call.1} parent=1 // pred_fallthru
      _
    // Predicated region
    $region26: #{tpu_custom_call.1} parent=1 // pred_check
      _
    $region27: #{tpu_custom_call.1} parent=1 // pred_check_branch
      %78 = sbr.rel (0) target = $region29
    $region28: #{tpu_custom_call.1} parent=1 // pred_region
      _
    $region29: #{tpu_custom_call.1} parent=1 // pred_fallthru
      _
    // Predicated region
    $region30: #{tpu_custom_call.1} parent=1 // pred_check
      _
    $region31: #{tpu_custom_call.1} parent=1 // pred_check_branch
      %80 = sbr.rel (0) target = $region33
    $region32: #{tpu_custom_call.1} parent=1 // pred_region
      %s82 = ssub.s32 2048, 2048
      %83 = vsyncadd [#allocation12], %s82
      %s84 = sshll.u32 [#allocation11], 4
      %s85 = int_to_ptr.vmem [resolvable:$true] %s84
      %90 = dma.hbm_to_vmem [thread:$0]  %s7, 2048, %s85, [#allocation12], 64, 64, 4
    $region33: #{tpu_custom_call.1} parent=1 // pred_fallthru
      _
    // Predicated region
    $region34: #{tpu_custom_call.1} parent=1 // pred_check
      _
    $region35: #{tpu_custom_call.1} parent=1 // pred_check_branch
      %92 = sbr.rel (0) target = $region37
    $region36: #{tpu_custom_call.1} parent=1 // pred_region
      _
    $region37: #{tpu_custom_call.1} parent=1 // pred_fallthru
      _
    // Predicated region
    $region38: #{tpu_custom_call.1} parent=1 // pred_check
      _
    $region39: #{tpu_custom_call.1} parent=1 // pred_check_branch
      %94 = sbr.rel (0) target = $region41
    $region40: #{tpu_custom_call.1} parent=1 // pred_region
      %95 = dma.done [#allocation3], 128
    $region41: #{tpu_custom_call.1} parent=1 // pred_fallthru
      _
    // Predicated region
    $region42: #{tpu_custom_call.1} parent=1 // pred_check
      _
    $region43: #{tpu_custom_call.1} parent=1 // pred_check_branch
      %97 = sbr.rel (0) target = $region45
    $region44: #{tpu_custom_call.1} parent=1 // pred_region
      %98 = dma.done [#allocation6], 256
    $region45: #{tpu_custom_call.1} parent=1 // pred_fallthru
      _
    // Predicated region
    $region46: #{tpu_custom_call.1} parent=1 // pred_check
      _
    $region47: #{tpu_custom_call.1} parent=1 // pred_check_branch
      %100 = sbr.rel (0) target = $region49
    $region48: #{tpu_custom_call.1} parent=1 // pred_region
      %101 = dma.done [#allocation6], 2048
    $region49: #{tpu_custom_call.1} parent=1 // pred_fallthru
      _
    // Predicated region
    $region50: #{tpu_custom_call.1} parent=1 // pred_check
      _
    $region51: #{tpu_custom_call.1} parent=1 // pred_check_branch
      %103 = sbr.rel (0) target = $region53
    $region52: #{tpu_custom_call.1} parent=1 // pred_region
      %104 = dma.done [#allocation9], 4096
    $region53: #{tpu_custom_call.1} parent=1 // pred_fallthru
      _
    // Predicated region
    $region54: #{tpu_custom_call.1} parent=1 // pred_check
      _
    $region55: #{tpu_custom_call.1} parent=1 // pred_check_branch
      %106 = sbr.rel (0) target = $region57
    $region56: #{tpu_custom_call.1} parent=1 // pred_region
      %107 = dma.done [#allocation9], 4096
    $region57: #{tpu_custom_call.1} parent=1 // pred_fallthru
      _
    // Predicated region
    $region58: #{tpu_custom_call.1} parent=1 // pred_check
      _
    $region59: #{tpu_custom_call.1} parent=1 // pred_check_branch
      %109 = sbr.rel (0) target = $region61
    $region60: #{tpu_custom_call.1} parent=1 // pred_region
      %110 = dma.done [#allocation12], 2048
    $region61: #{tpu_custom_call.1} parent=1 // pred_fallthru
      _
    %v112 = vld [vmem:[#allocation2] sm:$0xff]
    %v113 = vpack.c.bf16 %v112, %v112
    %v114 = vld [vmem:[#allocation5] sm:$0xff]
    %v115 = vld [vmem:[#allocation5 + $0x8] sm:$0xff]
    %v116 = vpack.c.bf16 %v114, %v114
    %v117 = vpack.c.bf16 %v115, %v115
    %v118 = vld [vmem:[#allocation7] sm:$0xff]
    %v119 = vld [vmem:[#allocation7 + $0x8] sm:$0xff]
    %v120 = vld [vmem:[#allocation7 + $0x10] sm:$0xff]
    %v121 = vld [vmem:[#allocation7 + $0x18] sm:$0xff]
    %v122 = vld [vmem:[#allocation7 + $0x20] sm:$0xff]
    %v123 = vld [vmem:[#allocation7 + $0x28] sm:$0xff]
    %v124 = vld [vmem:[#allocation7 + $0x30] sm:$0xff]
    %v125 = vld [vmem:[#allocation7 + $0x38] sm:$0xff]
    %v126 = vld [vmem:[#allocation7 + $0x40] sm:$0xff]
    %v127 = vld [vmem:[#allocation7 + $0x48] sm:$0xff]
    %v128 = vld [vmem:[#allocation7 + $0x50] sm:$0xff]
    %v129 = vld [vmem:[#allocation7 + $0x58] sm:$0xff]
    %v130 = vld [vmem:[#allocation7 + $0x60] sm:$0xff]
    %v131 = vld [vmem:[#allocation7 + $0x68] sm:$0xff]
    %v132 = vld [vmem:[#allocation7 + $0x70] sm:$0xff]
    %v133 = vld [vmem:[#allocation7 + $0x78] sm:$0xff]
    %v134 = vld [vmem:[#allocation8] sm:$0xff]
    %v135 = vld [vmem:[#allocation8 + $0x8] sm:$0xff]
    %v136 = vld [vmem:[#allocation8 + $0x10] sm:$0xff]
    %v137 = vld [vmem:[#allocation8 + $0x18] sm:$0xff]
    %v138 = vld [vmem:[#allocation8 + $0x20] sm:$0xff]
    %v139 = vld [vmem:[#allocation8 + $0x28] sm:$0xff]
    %v140 = vld [vmem:[#allocation8 + $0x30] sm:$0xff]
    %v141 = vld [vmem:[#allocation8 + $0x38] sm:$0xff]
    %v142 = vld [vmem:[#allocation8 + $0x40] sm:$0xff]
    %v143 = vld [vmem:[#allocation8 + $0x48] sm:$0xff]
    %v144 = vld [vmem:[#allocation8 + $0x50] sm:$0xff]
    %v145 = vld [vmem:[#allocation8 + $0x58] sm:$0xff]
    %v146 = vld [vmem:[#allocation8 + $0x60] sm:$0xff]
    %v147 = vld [vmem:[#allocation8 + $0x68] sm:$0xff]
    %v148 = vld [vmem:[#allocation8 + $0x70] sm:$0xff]
    %v149 = vld [vmem:[#allocation8 + $0x78] sm:$0xff]
    %v150 = vld [vmem:[#allocation8 + $0x80] sm:$0xff]
    %v151 = vld [vmem:[#allocation8 + $0x88] sm:$0xff]
    %v152 = vld [vmem:[#allocation8 + $0x90] sm:$0xff]
    %v153 = vld [vmem:[#allocation8 + $0x98] sm:$0xff]
    %v154 = vld [vmem:[#allocation8 + $0xa0] sm:$0xff]
    %v155 = vld [vmem:[#allocation8 + $0xa8] sm:$0xff]
    %v156 = vld [vmem:[#allocation8 + $0xb0] sm:$0xff]
    %v157 = vld [vmem:[#allocation8 + $0xb8] sm:$0xff]
    %v158 = vld [vmem:[#allocation8 + $0xc0] sm:$0xff]
    %v159 = vld [vmem:[#allocation8 + $0xc8] sm:$0xff]
    %v160 = vld [vmem:[#allocation8 + $0xd0] sm:$0xff]
    %v161 = vld [vmem:[#allocation8 + $0xd8] sm:$0xff]
    %v162 = vld [vmem:[#allocation8 + $0xe0] sm:$0xff]
    %v163 = vld [vmem:[#allocation8 + $0xe8] sm:$0xff]
    %v164 = vld [vmem:[#allocation8 + $0xf0] sm:$0xff]
    %v165 = vld [vmem:[#allocation8 + $0xf8] sm:$0xff]
    %v198 = vunpack.c.l.b16 %v134
    %v199 = vunpack.c.h.b16 %v134
    %v200 = vunpack.c.l.b16 %v135
    %v201 = vunpack.c.h.b16 %v135
    %v202 = vunpack.c.l.b16 %v136
    %v203 = vunpack.c.h.b16 %v136
    %v204 = vunpack.c.l.b16 %v137
    %v205 = vunpack.c.h.b16 %v137
    %v206 = vunpack.c.l.b16 %v138
    %v207 = vunpack.c.h.b16 %v138
    %v208 = vunpack.c.l.b16 %v139
    %v209 = vunpack.c.h.b16 %v139
    %v210 = vunpack.c.l.b16 %v140
    %v211 = vunpack.c.h.b16 %v140
    %v212 = vunpack.c.l.b16 %v141
    %v213 = vunpack.c.h.b16 %v141
    %v214 = vunpack.c.l.b16 %v142
    %v215 = vunpack.c.h.b16 %v142
    %v216 = vunpack.c.l.b16 %v143
    %v217 = vunpack.c.h.b16 %v143
    %v218 = vunpack.c.l.b16 %v144
    %v219 = vunpack.c.h.b16 %v144
    %v220 = vunpack.c.l.b16 %v145
    %v221 = vunpack.c.h.b16 %v145
    %v222 = vunpack.c.l.b16 %v146
    %v223 = vunpack.c.h.b16 %v146
    %v224 = vunpack.c.l.b16 %v147
    %v225 = vunpack.c.h.b16 %v147
    %v226 = vunpack.c.l.b16 %v148
    %v227 = vunpack.c.h.b16 %v148
    %v228 = vunpack.c.l.b16 %v149
    %v229 = vunpack.c.h.b16 %v149
    %v230 = vunpack.c.l.b16 %v150
    %v231 = vunpack.c.h.b16 %v150
    %v232 = vunpack.c.l.b16 %v151
    %v233 = vunpack.c.h.b16 %v151
    %v234 = vunpack.c.l.b16 %v152
    %v235 = vunpack.c.h.b16 %v152
    %v236 = vunpack.c.l.b16 %v153
    %v237 = vunpack.c.h.b16 %v153
    %v238 = vunpack.c.l.b16 %v154
    %v239 = vunpack.c.h.b16 %v154
    %v240 = vunpack.c.l.b16 %v155
    %v241 = vunpack.c.h.b16 %v155
    %v242 = vunpack.c.l.b16 %v156
    %v243 = vunpack.c.h.b16 %v156
    %v244 = vunpack.c.l.b16 %v157
    %v245 = vunpack.c.h.b16 %v157
    %v246 = vunpack.c.l.b16 %v158
    %v247 = vunpack.c.h.b16 %v158
    %v248 = vunpack.c.l.b16 %v159
    %v249 = vunpack.c.h.b16 %v159
    %v250 = vunpack.c.l.b16 %v160
    %v251 = vunpack.c.h.b16 %v160
    %v252 = vunpack.c.l.b16 %v161
    %v253 = vunpack.c.h.b16 %v161
    %v254 = vunpack.c.l.b16 %v162
    %v255 = vunpack.c.h.b16 %v162
    %v256 = vunpack.c.l.b16 %v163
    %v257 = vunpack.c.h.b16 %v163
    %v258 = vunpack.c.l.b16 %v164
    %v259 = vunpack.c.h.b16 %v164
    %v260 = vunpack.c.l.b16 %v165
    %v261 = vunpack.c.h.b16 %v165
    %v262 = vpack.c.b16 %v200, %v198
    %v263 = vpack.c.b16 %v201, %v199
    %v264 = vpack.c.b16 %v204, %v202
    %v265 = vpack.c.b16 %v205, %v203
    %v266 = vpack.c.b16 %v208, %v206
    %v267 = vpack.c.b16 %v209, %v207
    %v268 = vpack.c.b16 %v212, %v210
    %v269 = vpack.c.b16 %v213, %v211
    %v270 = vpack.c.b16 %v216, %v214
    %v271 = vpack.c.b16 %v217, %v215
    %v272 = vpack.c.b16 %v220, %v218
    %v273 = vpack.c.b16 %v221, %v219
    %v274 = vpack.c.b16 %v224, %v222
    %v275 = vpack.c.b16 %v225, %v223
    %v276 = vpack.c.b16 %v228, %v226
    %v277 = vpack.c.b16 %v229, %v227
    %v278 = vpack.c.b16 %v232, %v230
    %v279 = vpack.c.b16 %v233, %v231
    %v280 = vpack.c.b16 %v236, %v234
    %v281 = vpack.c.b16 %v237, %v235
    %v282 = vpack.c.b16 %v240, %v238
    %v283 = vpack.c.b16 %v241, %v239
    %v284 = vpack.c.b16 %v244, %v242
    %v285 = vpack.c.b16 %v245, %v243
    %v286 = vpack.c.b16 %v248, %v246
    %v287 = vpack.c.b16 %v249, %v247
    %v288 = vpack.c.b16 %v252, %v250
    %v289 = vpack.c.b16 %v253, %v251
    %v290 = vpack.c.b16 %v256, %v254
    %v291 = vpack.c.b16 %v257, %v255
    %v292 = vpack.c.b16 %v260, %v258
    %v293 = vpack.c.b16 %v261, %v259
    %326 = vmatprep.subr.bf16.mxu0 %v277
    %327 = vmatpush1.bf16.msra.mxu0 %v276
    %328 = vmatprep.subr.bf16.mxu0 %v275
    %329 = vmatpush1.bf16.msra.mxu0 %v274
    %330 = vmatprep.subr.bf16.mxu0 %v273
    %331 = vmatpush1.bf16.msra.mxu0 %v272
    %332 = vmatprep.subr.bf16.mxu0 %v271
    %333 = vmatpush1.bf16.msra.mxu0 %v270
    %334 = vmatprep.subr.bf16.mxu0 %v269
    %335 = vmatpush1.bf16.msra.mxu0 %v268
    %336 = vmatprep.subr.bf16.mxu0 %v267
    %337 = vmatpush1.bf16.msra.mxu0 %v266
    %338 = vmatprep.subr.bf16.mxu0 %v265
    %339 = vmatpush1.bf16.msra.mxu0 %v264
    %340 = vmatprep.subr.bf16.mxu0 %v263
    %341 = vmatpush1.bf16.msra.mxu0 %v262
    %342 = vmatprep.subr.bf16.mxu0 %v293
    %343 = vmatpush2.bf16.msra.mxu0 %v292
    %344 = vmatprep.subr.bf16.mxu0 %v291
    %345 = vmatpush2.bf16.msra.mxu0 %v290
    %346 = vmatprep.subr.bf16.mxu0 %v289
    %347 = vmatpush2.bf16.msra.mxu0 %v288
    %348 = vmatprep.subr.bf16.mxu0 %v287
    %349 = vmatpush2.bf16.msra.mxu0 %v286
    %350 = vmatprep.subr.bf16.mxu0 %v285
    %351 = vmatpush2.bf16.msra.mxu0 %v284
    %352 = vmatprep.subr.bf16.mxu0 %v283
    %353 = vmatpush2.bf16.msra.mxu0 %v282
    %354 = vmatprep.subr.bf16.mxu0 %v281
    %355 = vmatpush2.bf16.msra.mxu0 %v280
    %356 = vmatprep.subr.bf16.mxu0 %v279
    %357 = vmatpush2.bf16.msra.mxu0 %v278
    %358 = vmatprep.mubr.bf16.mxu0 %v117
    %359 = vmatmul.mubr.bf16.gmra.mxu0 %v116
    %v360 = vpop.f32.mrf.mxu0
    %v361 = vadd.f32 0.0, %v360
    %v362 = vpop.f32.mrf.mxu0
    %v363 = vadd.f32 0.0, %v362
    %v364 = vpop.f32.mrf.mxu0
    %v365 = vpop.f32.mrf.mxu0
    %366 = vdwg.mxu0
    %v383 = vunpack.c.l.b16 %v118
    %v384 = vunpack.c.h.b16 %v118
    %v385 = vunpack.c.l.b16 %v119
    %v386 = vunpack.c.h.b16 %v119
    %v387 = vunpack.c.l.b16 %v120
    %v388 = vunpack.c.h.b16 %v120
    %v389 = vunpack.c.l.b16 %v121
    %v390 = vunpack.c.h.b16 %v121
    %v391 = vunpack.c.l.b16 %v122
    %v392 = vunpack.c.h.b16 %v122
    %v393 = vunpack.c.l.b16 %v123
    %v394 = vunpack.c.h.b16 %v123
    %v395 = vunpack.c.l.b16 %v124
    %v396 = vunpack.c.h.b16 %v124
    %v397 = vunpack.c.l.b16 %v125
    %v398 = vunpack.c.h.b16 %v125
    %v399 = vunpack.c.l.b16 %v126
    %v400 = vunpack.c.h.b16 %v126
    %v401 = vunpack.c.l.b16 %v127
    %v402 = vunpack.c.h.b16 %v127
    %v403 = vunpack.c.l.b16 %v128
    %v404 = vunpack.c.h.b16 %v128
    %v405 = vunpack.c.l.b16 %v129
    %v406 = vunpack.c.h.b16 %v129
    %v407 = vunpack.c.l.b16 %v130
    %v408 = vunpack.c.h.b16 %v130
    %v409 = vunpack.c.l.b16 %v131
    %v410 = vunpack.c.h.b16 %v131
    %v411 = vunpack.c.l.b16 %v132
    %v412 = vunpack.c.h.b16 %v132
    %v413 = vunpack.c.l.b16 %v133
    %v414 = vunpack.c.h.b16 %v133
    %v415 = vpack.c.b16 %v385, %v383
    %v416 = vpack.c.b16 %v386, %v384
    %v417 = vpack.c.b16 %v389, %v387
    %v418 = vpack.c.b16 %v390, %v388
    %v419 = vpack.c.b16 %v393, %v391
    %v420 = vpack.c.b16 %v394, %v392
    %v421 = vpack.c.b16 %v397, %v395
    %v422 = vpack.c.b16 %v398, %v396
    %v423 = vpack.c.b16 %v401, %v399
    %v424 = vpack.c.b16 %v402, %v400
    %v425 = vpack.c.b16 %v405, %v403
    %v426 = vpack.c.b16 %v406, %v404
    %v427 = vpack.c.b16 %v409, %v407
    %v428 = vpack.c.b16 %v410, %v408
    %v429 = vpack.c.b16 %v413, %v411
    %v430 = vpack.c.b16 %v414, %v412
    %447 = vmatprep.subr.bf16.mxu0 %v430
    %448 = vmatpush1.bf16.msra.mxu0 %v429
    %449 = vmatprep.subr.bf16.mxu0 %v428
    %450 = vmatpush1.bf16.msra.mxu0 %v427
    %451 = vmatprep.subr.bf16.mxu0 %v426
    %452 = vmatpush1.bf16.msra.mxu0 %v425
    %453 = vmatprep.subr.bf16.mxu0 %v424
    %454 = vmatpush1.bf16.msra.mxu0 %v423
    %455 = vmatprep.subr.bf16.mxu0 %v422
    %456 = vmatpush1.bf16.msra.mxu0 %v421
    %457 = vmatprep.subr.bf16.mxu0 %v420
    %458 = vmatpush1.bf16.msra.mxu0 %v419
    %459 = vmatprep.subr.bf16.mxu0 %v418
    %460 = vmatpush1.bf16.msra.mxu0 %v417
    %461 = vmatprep.subr.bf16.mxu0 %v416
    %462 = vmatpush1.bf16.msra.mxu0 %v415
    %463 = vmatprep.subr.bf16.mxu0 0
    %464 = vmatpush2.bf16.msra.mxu0 0
    %465 = vmatprep.subr.bf16.mxu0 0
    %466 = vmatpush2.bf16.msra.mxu0 0
    %467 = vmatprep.subr.bf16.mxu0 0
    %468 = vmatpush2.bf16.msra.mxu0 0
    %469 = vmatprep.subr.bf16.mxu0 0
    %470 = vmatpush2.bf16.msra.mxu0 0
    %471 = vmatprep.subr.bf16.mxu0 0
    %472 = vmatpush2.bf16.msra.mxu0 0
    %473 = vmatprep.subr.bf16.mxu0 0
    %474 = vmatpush2.bf16.msra.mxu0 0
    %475 = vmatprep.subr.bf16.mxu0 0
    %476 = vmatpush2.bf16.msra.mxu0 0
    %477 = vmatprep.subr.bf16.mxu0 0
    %478 = vmatpush2.bf16.msra.mxu0 0
    %479 = vmatprep.mubr.bf16.mxu0 0
    %480 = vmatmul.mubr.bf16.gmra.mxu0 %v113
    %v481 = vpop.f32.mrf.mxu0
    %v482 = vadd.f32 %v361, %v481
    %v483 = vpop.f32.mrf.mxu0
    %v484 = vadd.f32 %v363, %v483
    %v485 = vpop.f32.mrf.mxu0
    %v486 = vpop.f32.mrf.mxu0
    %487 = vdwg.mxu0
    %v488 = vld [vmem:[%s4] sm:$0x3]
    %v490 = vlaneseq
    %v491 = vshrl.u32 %v490, 7
    %v492 = vsub.s32 0, %v491
    %v493 = vrot.slane %v488, %v492
    %v494 = vlaneseq
    %v495 = vshrl.u32 %v494, 7
    %v496 = vsub.s32 1, %v495
    %v497 = vrot.slane %v488, %v496
    %v500 = vadd.f32 %v482, %v493
    %v501 = vadd.f32 %v484, %v497
    %v502 = vmax.f32 %v500, 0.0
    %v503 = vmax.f32 %v501, 0.0
    %v504 = vpack.c.bf16 %v502, %v502
    %v505 = vpack.c.bf16 %v503, %v503
    %v506 = vld [vmem:[#allocation10] sm:$0xff]
    %v507 = vld [vmem:[#allocation10 + $0x8] sm:$0xff]
    %v508 = vld [vmem:[#allocation10 + $0x10] sm:$0xff]
    %v509 = vld [vmem:[#allocation10 + $0x18] sm:$0xff]
    %v510 = vld [vmem:[#allocation10 + $0x20] sm:$0xff]
    %v511 = vld [vmem:[#allocation10 + $0x28] sm:$0xff]
    %v512 = vld [vmem:[#allocation10 + $0x30] sm:$0xff]
    %v513 = vld [vmem:[#allocation10 + $0x38] sm:$0xff]
    %v514 = vld [vmem:[#allocation10 + $0x40] sm:$0xff]
    %v515 = vld [vmem:[#allocation10 + $0x48] sm:$0xff]
    %v516 = vld [vmem:[#allocation10 + $0x50] sm:$0xff]
    %v517 = vld [vmem:[#allocation10 + $0x58] sm:$0xff]
    %v518 = vld [vmem:[#allocation10 + $0x60] sm:$0xff]
    %v519 = vld [vmem:[#allocation10 + $0x68] sm:$0xff]
    %v520 = vld [vmem:[#allocation10 + $0x70] sm:$0xff]
    %v521 = vld [vmem:[#allocation10 + $0x78] sm:$0xff]
    %v522 = vld [vmem:[#allocation10 + $0x80] sm:$0xff]
    %v523 = vld [vmem:[#allocation10 + $0x88] sm:$0xff]
    %v524 = vld [vmem:[#allocation10 + $0x90] sm:$0xff]
    %v525 = vld [vmem:[#allocation10 + $0x98] sm:$0xff]
    %v526 = vld [vmem:[#allocation10 + $0xa0] sm:$0xff]
    %v527 = vld [vmem:[#allocation10 + $0xa8] sm:$0xff]
    %v528 = vld [vmem:[#allocation10 + $0xb0] sm:$0xff]
    %v529 = vld [vmem:[#allocation10 + $0xb8] sm:$0xff]
    %v530 = vld [vmem:[#allocation10 + $0xc0] sm:$0xff]
    %v531 = vld [vmem:[#allocation10 + $0xc8] sm:$0xff]
    %v532 = vld [vmem:[#allocation10 + $0xd0] sm:$0xff]
    %v533 = vld [vmem:[#allocation10 + $0xd8] sm:$0xff]
    %v534 = vld [vmem:[#allocation10 + $0xe0] sm:$0xff]
    %v535 = vld [vmem:[#allocation10 + $0xe8] sm:$0xff]
    %v536 = vld [vmem:[#allocation10 + $0xf0] sm:$0xff]
    %v537 = vld [vmem:[#allocation10 + $0xf8] sm:$0xff]
    %v538 = vld [vmem:[%s6] sm:$0x3]
    %v540 = vlaneseq
    %v541 = vshrl.u32 %v540, 7
    %v542 = vsub.s32 0, %v541
    %v543 = vrot.slane %v538, %v542
    %v544 = vlaneseq
    %v545 = vshrl.u32 %v544, 7
    %v546 = vsub.s32 1, %v545
    %v547 = vrot.slane %v538, %v546
    %v582 = vunpack.c.l.b16 %v506
    %v583 = vunpack.c.h.b16 %v506
    %v584 = vunpack.c.l.b16 %v507
    %v585 = vunpack.c.h.b16 %v507
    %v586 = vunpack.c.l.b16 %v508
    %v587 = vunpack.c.h.b16 %v508
    %v588 = vunpack.c.l.b16 %v509
    %v589 = vunpack.c.h.b16 %v509
    %v590 = vunpack.c.l.b16 %v510
    %v591 = vunpack.c.h.b16 %v510
    %v592 = vunpack.c.l.b16 %v511
    %v593 = vunpack.c.h.b16 %v511
    %v594 = vunpack.c.l.b16 %v512
    %v595 = vunpack.c.h.b16 %v512
    %v596 = vunpack.c.l.b16 %v513
    %v597 = vunpack.c.h.b16 %v513
    %v598 = vunpack.c.l.b16 %v514
    %v599 = vunpack.c.h.b16 %v514
    %v600 = vunpack.c.l.b16 %v515
    %v601 = vunpack.c.h.b16 %v515
    %v602 = vunpack.c.l.b16 %v516
    %v603 = vunpack.c.h.b16 %v516
    %v604 = vunpack.c.l.b16 %v517
    %v605 = vunpack.c.h.b16 %v517
    %v606 = vunpack.c.l.b16 %v518
    %v607 = vunpack.c.h.b16 %v518
    %v608 = vunpack.c.l.b16 %v519
    %v609 = vunpack.c.h.b16 %v519
    %v610 = vunpack.c.l.b16 %v520
    %v611 = vunpack.c.h.b16 %v520
    %v612 = vunpack.c.l.b16 %v521
    %v613 = vunpack.c.h.b16 %v521
    %v614 = vunpack.c.l.b16 %v522
    %v615 = vunpack.c.h.b16 %v522
    %v616 = vunpack.c.l.b16 %v523
    %v617 = vunpack.c.h.b16 %v523
    %v618 = vunpack.c.l.b16 %v524
    %v619 = vunpack.c.h.b16 %v524
    %v620 = vunpack.c.l.b16 %v525
    %v621 = vunpack.c.h.b16 %v525
    %v622 = vunpack.c.l.b16 %v526
    %v623 = vunpack.c.h.b16 %v526
    %v624 = vunpack.c.l.b16 %v527
    %v625 = vunpack.c.h.b16 %v527
    %v626 = vunpack.c.l.b16 %v528
    %v627 = vunpack.c.h.b16 %v528
    %v628 = vunpack.c.l.b16 %v529
    %v629 = vunpack.c.h.b16 %v529
    %v630 = vunpack.c.l.b16 %v530
    %v631 = vunpack.c.h.b16 %v530
    %v632 = vunpack.c.l.b16 %v531
    %v633 = vunpack.c.h.b16 %v531
    %v634 = vunpack.c.l.b16 %v532
    %v635 = vunpack.c.h.b16 %v532
    %v636 = vunpack.c.l.b16 %v533
    %v637 = vunpack.c.h.b16 %v533
    %v638 = vunpack.c.l.b16 %v534
    %v639 = vunpack.c.h.b16 %v534
    %v640 = vunpack.c.l.b16 %v535
    %v641 = vunpack.c.h.b16 %v535
    %v642 = vunpack.c.l.b16 %v536
    %v643 = vunpack.c.h.b16 %v536
    %v644 = vunpack.c.l.b16 %v537
    %v645 = vunpack.c.h.b16 %v537
    %v646 = vpack.c.b16 %v584, %v582
    %v647 = vpack.c.b16 %v585, %v583
    %v648 = vpack.c.b16 %v588, %v586
    %v649 = vpack.c.b16 %v589, %v587
    %v650 = vpack.c.b16 %v592, %v590
    %v651 = vpack.c.b16 %v593, %v591
    %v652 = vpack.c.b16 %v596, %v594
    %v653 = vpack.c.b16 %v597, %v595
    %v654 = vpack.c.b16 %v600, %v598
    %v655 = vpack.c.b16 %v601, %v599
    %v656 = vpack.c.b16 %v604, %v602
    %v657 = vpack.c.b16 %v605, %v603
    %v658 = vpack.c.b16 %v608, %v606
    %v659 = vpack.c.b16 %v609, %v607
    %v660 = vpack.c.b16 %v612, %v610
    %v661 = vpack.c.b16 %v613, %v611
    %v662 = vpack.c.b16 %v616, %v614
    %v663 = vpack.c.b16 %v617, %v615
    %v664 = vpack.c.b16 %v620, %v618
    %v665 = vpack.c.b16 %v621, %v619
    %v666 = vpack.c.b16 %v624, %v622
    %v667 = vpack.c.b16 %v625, %v623
    %v668 = vpack.c.b16 %v628, %v626
    %v669 = vpack.c.b16 %v629, %v627
    %v670 = vpack.c.b16 %v632, %v630
    %v671 = vpack.c.b16 %v633, %v631
    %v672 = vpack.c.b16 %v636, %v634
    %v673 = vpack.c.b16 %v637, %v635
    %v674 = vpack.c.b16 %v640, %v638
    %v675 = vpack.c.b16 %v641, %v639
    %v676 = vpack.c.b16 %v644, %v642
    %v677 = vpack.c.b16 %v645, %v643
    %710 = vmatprep.subr.bf16.mxu0 %v661
    %711 = vmatpush1.bf16.msra.mxu0 %v660
    %712 = vmatprep.subr.bf16.mxu0 %v659
    %713 = vmatpush1.bf16.msra.mxu0 %v658
    %714 = vmatprep.subr.bf16.mxu0 %v657
    %715 = vmatpush1.bf16.msra.mxu0 %v656
    %716 = vmatprep.subr.bf16.mxu0 %v655
    %717 = vmatpush1.bf16.msra.mxu0 %v654
    %718 = vmatprep.subr.bf16.mxu0 %v653
    %719 = vmatpush1.bf16.msra.mxu0 %v652
    %720 = vmatprep.subr.bf16.mxu0 %v651
    %721 = vmatpush1.bf16.msra.mxu0 %v650
    %722 = vmatprep.subr.bf16.mxu0 %v649
    %723 = vmatpush1.bf16.msra.mxu0 %v648
    %724 = vmatprep.subr.bf16.mxu0 %v647
    %725 = vmatpush1.bf16.msra.mxu0 %v646
    %726 = vmatprep.subr.bf16.mxu0 %v677
    %727 = vmatpush2.bf16.msra.mxu0 %v676
    %728 = vmatprep.subr.bf16.mxu0 %v675
    %729 = vmatpush2.bf16.msra.mxu0 %v674
    %730 = vmatprep.subr.bf16.mxu0 %v673
    %731 = vmatpush2.bf16.msra.mxu0 %v672
    %732 = vmatprep.subr.bf16.mxu0 %v671
    %733 = vmatpush2.bf16.msra.mxu0 %v670
    %734 = vmatprep.subr.bf16.mxu0 %v669
    %735 = vmatpush2.bf16.msra.mxu0 %v668
    %736 = vmatprep.subr.bf16.mxu0 %v667
    %737 = vmatpush2.bf16.msra.mxu0 %v666
    %738 = vmatprep.subr.bf16.mxu0 %v665
    %739 = vmatpush2.bf16.msra.mxu0 %v664
    %740 = vmatprep.subr.bf16.mxu0 %v663
    %741 = vmatpush2.bf16.msra.mxu0 %v662
    %742 = vmatprep.mubr.bf16.mxu0 %v505
    %743 = vmatmul.mubr.bf16.gmra.mxu0 %v504
    %v744 = vpop.f32.mrf.mxu0
    %v745 = vadd.f32 %v543, %v744
    %v746 = vpop.f32.mrf.mxu0
    %v747 = vadd.f32 %v547, %v746
    %v748 = vpop.f32.mrf.mxu0
    %v749 = vpop.f32.mrf.mxu0
    %750 = vdwg.mxu0
    %v751 = vmax.f32 %v745, 0.0
    %v752 = vmax.f32 %v747, 0.0
    %v753 = vpack.c.bf16 %v751, %v751
    %v754 = vpack.c.bf16 %v752, %v752
    %v755 = vld [vmem:[#allocation11] sm:$0xf]
    %v756 = vld [vmem:[#allocation11 + $0x4] sm:$0xf]
    %v757 = vld [vmem:[#allocation11 + $0x8] sm:$0xf]
    %v758 = vld [vmem:[#allocation11 + $0xc] sm:$0xf]
    %v759 = vld [vmem:[#allocation11 + $0x10] sm:$0xf]
    %v760 = vld [vmem:[#allocation11 + $0x14] sm:$0xf]
    %v761 = vld [vmem:[#allocation11 + $0x18] sm:$0xf]
    %v762 = vld [vmem:[#allocation11 + $0x1c] sm:$0xf]
    %v763 = vld [vmem:[#allocation11 + $0x20] sm:$0xf]
    %v764 = vld [vmem:[#allocation11 + $0x24] sm:$0xf]
    %v765 = vld [vmem:[#allocation11 + $0x28] sm:$0xf]
    %v766 = vld [vmem:[#allocation11 + $0x2c] sm:$0xf]
    %v767 = vld [vmem:[#allocation11 + $0x30] sm:$0xf]
    %v768 = vld [vmem:[#allocation11 + $0x34] sm:$0xf]
    %v769 = vld [vmem:[#allocation11 + $0x38] sm:$0xf]
    %v770 = vld [vmem:[#allocation11 + $0x3c] sm:$0xf]
    %v771 = vld [vmem:[#allocation11 + $0x40] sm:$0xf]
    %v772 = vld [vmem:[#allocation11 + $0x44] sm:$0xf]
    %v773 = vld [vmem:[#allocation11 + $0x48] sm:$0xf]
    %v774 = vld [vmem:[#allocation11 + $0x4c] sm:$0xf]
    %v775 = vld [vmem:[#allocation11 + $0x50] sm:$0xf]
    %v776 = vld [vmem:[#allocation11 + $0x54] sm:$0xf]
    %v777 = vld [vmem:[#allocation11 + $0x58] sm:$0xf]
    %v778 = vld [vmem:[#allocation11 + $0x5c] sm:$0xf]
    %v779 = vld [vmem:[#allocation11 + $0x60] sm:$0xf]
    %v780 = vld [vmem:[#allocation11 + $0x64] sm:$0xf]
    %v781 = vld [vmem:[#allocation11 + $0x68] sm:$0xf]
    %v782 = vld [vmem:[#allocation11 + $0x6c] sm:$0xf]
    %v783 = vld [vmem:[#allocation11 + $0x70] sm:$0xf]
    %v784 = vld [vmem:[#allocation11 + $0x74] sm:$0xf]
    %v785 = vld [vmem:[#allocation11 + $0x78] sm:$0xf]
    %v786 = vld [vmem:[#allocation11 + $0x7c] sm:$0xf]
    %v787 = vld [vmem:[%s8] sm:$0x1]
    %v789 = vlaneseq
    %v790 = vshrl.u32 %v789, 7
    %v791 = vsub.s32 0, %v790
    %v792 = vrot.slane %v787, %v791
    %v826 = vunpack.c.l.b16 %v755
    %v827 = vunpack.c.l.b16 %v756
    %v828 = vunpack.c.l.b16 %v757
    %v829 = vunpack.c.l.b16 %v758
    %v830 = vunpack.c.l.b16 %v759
    %v831 = vunpack.c.l.b16 %v760
    %v832 = vunpack.c.l.b16 %v761
    %v833 = vunpack.c.l.b16 %v762
    %v834 = vunpack.c.l.b16 %v763
    %v835 = vunpack.c.l.b16 %v764
    %v836 = vunpack.c.l.b16 %v765
    %v837 = vunpack.c.l.b16 %v766
    %v838 = vunpack.c.l.b16 %v767
    %v839 = vunpack.c.l.b16 %v768
    %v840 = vunpack.c.l.b16 %v769
    %v841 = vunpack.c.l.b16 %v770
    %v842 = vunpack.c.l.b16 %v771
    %v843 = vunpack.c.l.b16 %v772
    %v844 = vunpack.c.l.b16 %v773
    %v845 = vunpack.c.l.b16 %v774
    %v846 = vunpack.c.l.b16 %v775
    %v847 = vunpack.c.l.b16 %v776
    %v848 = vunpack.c.l.b16 %v777
    %v849 = vunpack.c.l.b16 %v778
    %v850 = vunpack.c.l.b16 %v779
    %v851 = vunpack.c.l.b16 %v780
    %v852 = vunpack.c.l.b16 %v781
    %v853 = vunpack.c.l.b16 %v782
    %v854 = vunpack.c.l.b16 %v783
    %v855 = vunpack.c.l.b16 %v784
    %v856 = vunpack.c.l.b16 %v785
    %v857 = vunpack.c.l.b16 %v786
    %v858 = vpack.c.b16 %v827, %v826
    %v859 = vpack.c.b16 %v829, %v828
    %v860 = vpack.c.b16 %v831, %v830
    %v861 = vpack.c.b16 %v833, %v832
    %v862 = vpack.c.b16 %v835, %v834
    %v863 = vpack.c.b16 %v837, %v836
    %v864 = vpack.c.b16 %v839, %v838
    %v865 = vpack.c.b16 %v841, %v840
    %v866 = vpack.c.b16 %v843, %v842
    %v867 = vpack.c.b16 %v845, %v844
    %v868 = vpack.c.b16 %v847, %v846
    %v869 = vpack.c.b16 %v849, %v848
    %v870 = vpack.c.b16 %v851, %v850
    %v871 = vpack.c.b16 %v853, %v852
    %v872 = vpack.c.b16 %v855, %v854
    %v873 = vpack.c.b16 %v857, %v856
    %890 = vmatprep.subr.bf16.mxu0 0
    %891 = vmatpush1.bf16.msra.mxu0 %v865
    %892 = vmatprep.subr.bf16.mxu0 0
    %893 = vmatpush1.bf16.msra.mxu0 %v864
    %894 = vmatprep.subr.bf16.mxu0 0
    %895 = vmatpush1.bf16.msra.mxu0 %v863
    %896 = vmatprep.subr.bf16.mxu0 0
    %897 = vmatpush1.bf16.msra.mxu0 %v862
    %898 = vmatprep.subr.bf16.mxu0 0
    %899 = vmatpush1.bf16.msra.mxu0 %v861
    %900 = vmatprep.subr.bf16.mxu0 0
    %901 = vmatpush1.bf16.msra.mxu0 %v860
    %902 = vmatprep.subr.bf16.mxu0 0
    %903 = vmatpush1.bf16.msra.mxu0 %v859
    %904 = vmatprep.subr.bf16.mxu0 0
    %905 = vmatpush1.bf16.msra.mxu0 %v858
    %906 = vmatprep.subr.bf16.mxu0 0
    %907 = vmatpush2.bf16.msra.mxu0 %v873
    %908 = vmatprep.subr.bf16.mxu0 0
    %909 = vmatpush2.bf16.msra.mxu0 %v872
    %910 = vmatprep.subr.bf16.mxu0 0
    %911 = vmatpush2.bf16.msra.mxu0 %v871
    %912 = vmatprep.subr.bf16.mxu0 0
    %913 = vmatpush2.bf16.msra.mxu0 %v870
    %914 = vmatprep.subr.bf16.mxu0 0
    %915 = vmatpush2.bf16.msra.mxu0 %v869
    %916 = vmatprep.subr.bf16.mxu0 0
    %917 = vmatpush2.bf16.msra.mxu0 %v868
    %918 = vmatprep.subr.bf16.mxu0 0
    %919 = vmatpush2.bf16.msra.mxu0 %v867
    %920 = vmatprep.subr.bf16.mxu0 0
    %921 = vmatpush2.bf16.msra.mxu0 %v866
    %922 = vmatprep.mubr.bf16.mxu0 %v754
    %923 = vmatmul.mubr.bf16.gmra.mxu0 %v753
    %v924 = vpop.f32.mrf.mxu0
    %v925 = vadd.f32 %v792, %v924
    %v926 = vpop.f32.mrf.mxu0
    %v927 = vpop.f32.mrf.mxu0
    %v928 = vpop.f32.mrf.mxu0
    %929 = vdwg.mxu0
    %930 = vst [vmem:[#allocation13] sm:$0xff] %v925
    // Predicated region
    $region62: #{tpu_custom_call.1} parent=1 // pred_check
      _
    $region63: #{tpu_custom_call.1} parent=1 // pred_check_branch
      %932 = sbr.rel (0) target = $region65
    $region64: #{tpu_custom_call.1} parent=1 // pred_region
      %s934 = ssub.s32 128, 128
      %935 = vsyncadd [#allocation4], %s934
      %s937 = sshll.u32 [#allocation13], 4
      %s938 = int_to_ptr.vmem [resolvable:$true] %s937
      %940 = dma.vmem_to_hbm [thread:$0]  %s938, 128, %s9, [#allocation4]
    $region65: #{tpu_custom_call.1} parent=1 // pred_fallthru
      _
    // Predicated region
    $region66: #{tpu_custom_call.1} parent=1 // pred_check
      _
    $region67: #{tpu_custom_call.1} parent=1 // pred_check_branch
      %942 = sbr.rel (0) target = $region69
    $region68: #{tpu_custom_call.1} parent=1 // pred_region
      %943 = dma.done [#allocation4], 128
    $region69: #{tpu_custom_call.1} parent=1 // pred_fallthru
      _
    %944 = vsyncpa [#allocation3], 1
    %945 = vsyncpa [#allocation6], 1
    %946 = vsyncpa [#allocation9], 1
    %947 = vsyncpa [#allocation12], 1
    %948 = vsyncpa [#allocation4], 1

// kernel: tpu_custom_call.1
$region0: #{tpu_custom_call.1}
  #allocation0 [shape = 'u32[]', space=smem, size = 0x4, offset = 0x4, fixed_abs, tag = 'smem constant byte address 0x4 - core index']
  #allocation1 [shape = 'u32[144,128]{1,0:T(1,128)}', space=vmem, size = 0x12000, scoped, tag = 'internal scratch']
  %s0 = inlined_call_operand.hbm [shape: f32[8,128], index: 0, kind: input, shape index: {}]
  %s1 = inlined_call_operand.hbm [shape: f32[8,256], index: 1, kind: input, shape index: {}]
  %s2 = inlined_call_operand.hbm [shape: bf16[128,256], index: 2, kind: input, shape index: {}]
  %s3 = inlined_call_operand.hbm [shape: bf16[256,256], index: 3, kind: input, shape index: {}]
  %s4 = inlined_call_operand.vmem [shape: f32[1,256], index: 4, kind: input, shape index: {}]
  %s5 = inlined_call_operand.hbm [shape: bf16[256,256], index: 5, kind: input, shape index: {}]
  %s6 = inlined_call_operand.vmem [shape: f32[1,256], index: 6, kind: input, shape index: {}]
  %s7 = inlined_call_operand.hbm [shape: bf16[256,128], index: 7, kind: input, shape index: {}]
  %s8 = inlined_call_operand.vmem [shape: f32[1,128], index: 8, kind: input, shape index: {}]
  %s9 = inlined_call_operand.hbm [shape: f32[8,128], index: 9, kind: output, shape index: {}]
  %s10 = sld [smem:[#allocation0]]
  $region70: #{tpu_custom_call.1} parent=0
    _
  %s12 = ssub.s32 1, %s10
  %s13 = scalar_select 0, %s12, %s10
  $region1: #{tpu_custom_call.1} parent=0
    #allocation2 [shape = 'u8[4096]{0}', space=vmem, size = 0x1000, scoped, tag = 'input window, operand 0, single buffered']
    #allocation3 [shape = 's32[1]{0}', space=sflag, size = 0x4, scoped, tag = 'scoped memory for tpu_custom_call.1']
    #allocation4 [shape = 's32[1]{0}', space=sflag, size = 0x4, scoped, tag = 'scoped memory for tpu_custom_call.1']
    #allocation5 [shape = 'u8[8192]{0}', space=vmem, size = 0x2000, scoped, tag = 'input window, operand 1, single buffered']
    #allocation6 [shape = 's32[1]{0}', space=sflag, size = 0x4, scoped, tag = 'scoped memory for tpu_custom_call.1']
    #allocation7 [shape = 'u8[65536]{0}', space=vmem, size = 0x10000, scoped, tag = 'input window, operand 2, single buffered']
    #allocation8 [shape = 'u8[131072]{0}', space=vmem, size = 0x20000, scoped, tag = 'input window, operand 3, single buffered']
    #allocation9 [shape = 's32[1]{0}', space=sflag, size = 0x4, scoped, tag = 'scoped memory for tpu_custom_call.1']
    #allocation10 [shape = 'u8[131072]{0}', space=vmem, size = 0x20000, scoped, tag = 'input window, operand 5, single buffered']
    #allocation11 [shape = 'u8[65536]{0}', space=vmem, size = 0x10000, scoped, tag = 'input window, operand 7, single buffered']
    #allocation12 [shape = 's32[1]{0}', space=sflag, size = 0x4, scoped, tag = 'scoped memory for tpu_custom_call.1']
    #allocation13 [shape = 'u8[4096]{0}', space=vmem, size = 0x1000, scoped, tag = 'output window, operand 0, single buffered']
    %14 = vsyncpa [#allocation3], 0
    %15 = vsyncpa [#allocation6], 0
    %16 = vsyncpa [#allocation9], 0
    %17 = vsyncpa [#allocation12], 0
    %18 = vsyncpa [#allocation4], 0
    // Predicated region
    $region2: #{tpu_custom_call.1} parent=1 // pred_check
      _
    $region3: #{tpu_custom_call.1} parent=1 // pred_check_branch
      %20 = sbr.rel (0) target = $region5
    $region4: #{tpu_custom_call.1} parent=1 // pred_region
      %s22 = ssub.s32 128, 128
      %23 = vsyncadd [#allocation3], %s22
      %s25 = sshll.u32 [#allocation2], 4
      %s26 = int_to_ptr.vmem [resolvable:$true] %s25
      %28 = dma.hbm_to_vmem [thread:$0]  %s0, 128, %s26, [#allocation3]
    $region5: #{tpu_custom_call.1} parent=1 // pred_fallthru
      _
    // Predicated region
    $region6: #{tpu_custom_call.1} parent=1 // pred_check
      _
    $region7: #{tpu_custom_call.1} parent=1 // pred_check_branch
      %30 = sbr.rel (0) target = $region9
    $region8: #{tpu_custom_call.1} parent=1 // pred_region
      %s32 = ssub.s32 256, 256
      %33 = vsyncadd [#allocation6], %s32
      %s35 = sshll.u32 [#allocation5], 4
      %s36 = int_to_ptr.vmem [resolvable:$true] %s35
      %38 = dma.hbm_to_vmem [thread:$0]  %s1, 256, %s36, [#allocation6]
    $region9: #{tpu_custom_call.1} parent=1 // pred_fallthru
      _
    // Predicated region
    $region10: #{tpu_custom_call.1} parent=1 // pred_check
      _
    $region11: #{tpu_custom_call.1} parent=1 // pred_check_branch
      %40 = sbr.rel (0) target = $region13
    $region12: #{tpu_custom_call.1} parent=1 // pred_region
      %s42 = ssub.s32 2048, 2048
      %43 = vsyncadd [#allocation6], %s42
      %s44 = sshll.u32 [#allocation7], 4
      %s45 = int_to_ptr.vmem [resolvable:$true] %s44
      %50 = dma.hbm_to_vmem [thread:$0]  %s2, 2048, %s45, [#allocation6], 128, 128, 8
    $region13: #{tpu_custom_call.1} parent=1 // pred_fallthru
      _
    // Predicated region
    $region14: #{tpu_custom_call.1} parent=1 // pred_check
      _
    $region15: #{tpu_custom_call.1} parent=1 // pred_check_branch
      %52 = sbr.rel (0) target = $region17
    $region16: #{tpu_custom_call.1} parent=1 // pred_region
      %s54 = ssub.s32 4096, 4096
      %55 = vsyncadd [#allocation9], %s54
      %s56 = sshll.u32 [#allocation8], 4
      %s57 = int_to_ptr.vmem [resolvable:$true] %s56
      %62 = dma.hbm_to_vmem [thread:$0]  %s3, 4096, %s57, [#allocation9], 128, 128, 8
    $region17: #{tpu_custom_call.1} parent=1 // pred_fallthru
      _
    // Predicated region
    $region18: #{tpu_custom_call.1} parent=1 // pred_check
      _
    $region19: #{tpu_custom_call.1} parent=1 // pred_check_branch
      %64 = sbr.rel (0) target = $region21
    $region20: #{tpu_custom_call.1} parent=1 // pred_region
      _
    $region21: #{tpu_custom_call.1} parent=1 // pred_fallthru
      _
    // Predicated region
    $region22: #{tpu_custom_call.1} parent=1 // pred_check
      _
    $region23: #{tpu_custom_call.1} parent=1 // pred_check_branch
      %66 = sbr.rel (0) target = $region25
    $region24: #{tpu_custom_call.1} parent=1 // pred_region
      %s68 = ssub.s32 4096, 4096
      %69 = vsyncadd [#allocation9], %s68
      %s70 = sshll.u32 [#allocation10], 4
      %s71 = int_to_ptr.vmem [resolvable:$true] %s70
      %76 = dma.hbm_to_vmem [thread:$0]  %s5, 4096, %s71, [#allocation9], 128, 128, 8
    $region25: #{tpu_custom_call.1} parent=1 // pred_fallthru
      _
    // Predicated region
    $region26: #{tpu_custom_call.1} parent=1 // pred_check
      _
    $region27: #{tpu_custom_call.1} parent=1 // pred_check_branch
      %78 = sbr.rel (0) target = $region29
    $region28: #{tpu_custom_call.1} parent=1 // pred_region
      _
    $region29: #{tpu_custom_call.1} parent=1 // pred_fallthru
      _
    // Predicated region
    $region30: #{tpu_custom_call.1} parent=1 // pred_check
      _
    $region31: #{tpu_custom_call.1} parent=1 // pred_check_branch
      %80 = sbr.rel (0) target = $region33
    $region32: #{tpu_custom_call.1} parent=1 // pred_region
      %s82 = ssub.s32 2048, 2048
      %83 = vsyncadd [#allocation12], %s82
      %s84 = sshll.u32 [#allocation11], 4
      %s85 = int_to_ptr.vmem [resolvable:$true] %s84
      %90 = dma.hbm_to_vmem [thread:$0]  %s7, 2048, %s85, [#allocation12], 64, 64, 4
    $region33: #{tpu_custom_call.1} parent=1 // pred_fallthru
      _
    // Predicated region
    $region34: #{tpu_custom_call.1} parent=1 // pred_check
      _
    $region35: #{tpu_custom_call.1} parent=1 // pred_check_branch
      %92 = sbr.rel (0) target = $region37
    $region36: #{tpu_custom_call.1} parent=1 // pred_region
      _
    $region37: #{tpu_custom_call.1} parent=1 // pred_fallthru
      _
    // Predicated region
    $region38: #{tpu_custom_call.1} parent=1 // pred_check
      _
    $region39: #{tpu_custom_call.1} parent=1 // pred_check_branch
      %94 = sbr.rel (0) target = $region41
    $region40: #{tpu_custom_call.1} parent=1 // pred_region
      %95 = dma.done [#allocation3], 128
    $region41: #{tpu_custom_call.1} parent=1 // pred_fallthru
      _
    // Predicated region
    $region42: #{tpu_custom_call.1} parent=1 // pred_check
      _
    $region43: #{tpu_custom_call.1} parent=1 // pred_check_branch
      %97 = sbr.rel (0) target = $region45
    $region44: #{tpu_custom_call.1} parent=1 // pred_region
      %98 = dma.done [#allocation6], 256
    $region45: #{tpu_custom_call.1} parent=1 // pred_fallthru
      _
    // Predicated region
    $region46: #{tpu_custom_call.1} parent=1 // pred_check
      _
    $region47: #{tpu_custom_call.1} parent=1 // pred_check_branch
      %100 = sbr.rel (0) target = $region49
    $region48: #{tpu_custom_call.1} parent=1 // pred_region
      %101 = dma.done [#allocation6], 2048
    $region49: #{tpu_custom_call.1} parent=1 // pred_fallthru
      _
    // Predicated region
    $region50: #{tpu_custom_call.1} parent=1 // pred_check
      _
    $region51: #{tpu_custom_call.1} parent=1 // pred_check_branch
      %103 = sbr.rel (0) target = $region53
    $region52: #{tpu_custom_call.1} parent=1 // pred_region
      %104 = dma.done [#allocation9], 4096
    $region53: #{tpu_custom_call.1} parent=1 // pred_fallthru
      _
    // Predicated region
    $region54: #{tpu_custom_call.1} parent=1 // pred_check
      _
    $region55: #{tpu_custom_call.1} parent=1 // pred_check_branch
      %106 = sbr.rel (0) target = $region57
    $region56: #{tpu_custom_call.1} parent=1 // pred_region
      %107 = dma.done [#allocation9], 4096
    $region57: #{tpu_custom_call.1} parent=1 // pred_fallthru
      _
    // Predicated region
    $region58: #{tpu_custom_call.1} parent=1 // pred_check
      _
    $region59: #{tpu_custom_call.1} parent=1 // pred_check_branch
      %109 = sbr.rel (0) target = $region61
    $region60: #{tpu_custom_call.1} parent=1 // pred_region
      %110 = dma.done [#allocation12], 2048
    $region61: #{tpu_custom_call.1} parent=1 // pred_fallthru
      _
    %v112 = vld [vmem:[#allocation2] sm:$0xff]
    %v113 = vpack.c.bf16 %v112, %v112
    %v114 = vld [vmem:[#allocation5] sm:$0xff]
    %v115 = vld [vmem:[#allocation5 + $0x8] sm:$0xff]
    %v116 = vpack.c.bf16 %v114, %v114
    %v117 = vpack.c.bf16 %v115, %v115
    %v118 = vld [vmem:[#allocation7] sm:$0xff]
    %v119 = vld [vmem:[#allocation7 + $0x8] sm:$0xff]
    %v120 = vld [vmem:[#allocation7 + $0x10] sm:$0xff]
    %v121 = vld [vmem:[#allocation7 + $0x18] sm:$0xff]
    %v122 = vld [vmem:[#allocation7 + $0x20] sm:$0xff]
    %v123 = vld [vmem:[#allocation7 + $0x28] sm:$0xff]
    %v124 = vld [vmem:[#allocation7 + $0x30] sm:$0xff]
    %v125 = vld [vmem:[#allocation7 + $0x38] sm:$0xff]
    %v126 = vld [vmem:[#allocation7 + $0x40] sm:$0xff]
    %v127 = vld [vmem:[#allocation7 + $0x48] sm:$0xff]
    %v128 = vld [vmem:[#allocation7 + $0x50] sm:$0xff]
    %v129 = vld [vmem:[#allocation7 + $0x58] sm:$0xff]
    %v130 = vld [vmem:[#allocation7 + $0x60] sm:$0xff]
    %v131 = vld [vmem:[#allocation7 + $0x68] sm:$0xff]
    %v132 = vld [vmem:[#allocation7 + $0x70] sm:$0xff]
    %v133 = vld [vmem:[#allocation7 + $0x78] sm:$0xff]
    %v134 = vld [vmem:[#allocation8] sm:$0xff]
    %v135 = vld [vmem:[#allocation8 + $0x8] sm:$0xff]
    %v136 = vld [vmem:[#allocation8 + $0x10] sm:$0xff]
    %v137 = vld [vmem:[#allocation8 + $0x18] sm:$0xff]
    %v138 = vld [vmem:[#allocation8 + $0x20] sm:$0xff]
    %v139 = vld [vmem:[#allocation8 + $0x28] sm:$0xff]
    %v140 = vld [vmem:[#allocation8 + $0x30] sm:$0xff]
    %v141 = vld [vmem:[#allocation8 + $0x38] sm:$0xff]
    %v142 = vld [vmem:[#allocation8 + $0x40] sm:$0xff]
    %v143 = vld [vmem:[#allocation8 + $0x48] sm:$0xff]
    %v144 = vld [vmem:[#allocation8 + $0x50] sm:$0xff]
    %v145 = vld [vmem:[#allocation8 + $0x58] sm:$0xff]
    %v146 = vld [vmem:[#allocation8 + $0x60] sm:$0xff]
    %v147 = vld [vmem:[#allocation8 + $0x68] sm:$0xff]
    %v148 = vld [vmem:[#allocation8 + $0x70] sm:$0xff]
    %v149 = vld [vmem:[#allocation8 + $0x78] sm:$0xff]
    %v150 = vld [vmem:[#allocation8 + $0x80] sm:$0xff]
    %v151 = vld [vmem:[#allocation8 + $0x88] sm:$0xff]
    %v152 = vld [vmem:[#allocation8 + $0x90] sm:$0xff]
    %v153 = vld [vmem:[#allocation8 + $0x98] sm:$0xff]
    %v154 = vld [vmem:[#allocation8 + $0xa0] sm:$0xff]
    %v155 = vld [vmem:[#allocation8 + $0xa8] sm:$0xff]
    %v156 = vld [vmem:[#allocation8 + $0xb0] sm:$0xff]
    %v157 = vld [vmem:[#allocation8 + $0xb8] sm:$0xff]
    %v158 = vld [vmem:[#allocation8 + $0xc0] sm:$0xff]
    %v159 = vld [vmem:[#allocation8 + $0xc8] sm:$0xff]
    %v160 = vld [vmem:[#allocation8 + $0xd0] sm:$0xff]
    %v161 = vld [vmem:[#allocation8 + $0xd8] sm:$0xff]
    %v162 = vld [vmem:[#allocation8 + $0xe0] sm:$0xff]
    %v163 = vld [vmem:[#allocation8 + $0xe8] sm:$0xff]
    %v164 = vld [vmem:[#allocation8 + $0xf0] sm:$0xff]
    %v165 = vld [vmem:[#allocation8 + $0xf8] sm:$0xff]
    %v198 = vunpack.c.l.b16 %v134
    %v199 = vunpack.c.h.b16 %v134
    %v200 = vunpack.c.l.b16 %v135
    %v201 = vunpack.c.h.b16 %v135
    %v202 = vunpack.c.l.b16 %v136
    %v203 = vunpack.c.h.b16 %v136
    %v204 = vunpack.c.l.b16 %v137
    %v205 = vunpack.c.h.b16 %v137
    %v206 = vunpack.c.l.b16 %v138
    %v207 = vunpack.c.h.b16 %v138
    %v208 = vunpack.c.l.b16 %v139
    %v209 = vunpack.c.h.b16 %v139
    %v210 = vunpack.c.l.b16 %v140
    %v211 = vunpack.c.h.b16 %v140
    %v212 = vunpack.c.l.b16 %v141
    %v213 = vunpack.c.h.b16 %v141
    %v214 = vunpack.c.l.b16 %v142
    %v215 = vunpack.c.h.b16 %v142
    %v216 = vunpack.c.l.b16 %v143
    %v217 = vunpack.c.h.b16 %v143
    %v218 = vunpack.c.l.b16 %v144
    %v219 = vunpack.c.h.b16 %v144
    %v220 = vunpack.c.l.b16 %v145
    %v221 = vunpack.c.h.b16 %v145
    %v222 = vunpack.c.l.b16 %v146
    %v223 = vunpack.c.h.b16 %v146
    %v224 = vunpack.c.l.b16 %v147
    %v225 = vunpack.c.h.b16 %v147
    %v226 = vunpack.c.l.b16 %v148
    %v227 = vunpack.c.h.b16 %v148
    %v228 = vunpack.c.l.b16 %v149
    %v229 = vunpack.c.h.b16 %v149
    %v230 = vunpack.c.l.b16 %v150
    %v231 = vunpack.c.h.b16 %v150
    %v232 = vunpack.c.l.b16 %v151
    %v233 = vunpack.c.h.b16 %v151
    %v234 = vunpack.c.l.b16 %v152
    %v235 = vunpack.c.h.b16 %v152
    %v236 = vunpack.c.l.b16 %v153
    %v237 = vunpack.c.h.b16 %v153
    %v238 = vunpack.c.l.b16 %v154
    %v239 = vunpack.c.h.b16 %v154
    %v240 = vunpack.c.l.b16 %v155
    %v241 = vunpack.c.h.b16 %v155
    %v242 = vunpack.c.l.b16 %v156
    %v243 = vunpack.c.h.b16 %v156
    %v244 = vunpack.c.l.b16 %v157
    %v245 = vunpack.c.h.b16 %v157
    %v246 = vunpack.c.l.b16 %v158
    %v247 = vunpack.c.h.b16 %v158
    %v248 = vunpack.c.l.b16 %v159
    %v249 = vunpack.c.h.b16 %v159
    %v250 = vunpack.c.l.b16 %v160
    %v251 = vunpack.c.h.b16 %v160
    %v252 = vunpack.c.l.b16 %v161
    %v253 = vunpack.c.h.b16 %v161
    %v254 = vunpack.c.l.b16 %v162
    %v255 = vunpack.c.h.b16 %v162
    %v256 = vunpack.c.l.b16 %v163
    %v257 = vunpack.c.h.b16 %v163
    %v258 = vunpack.c.l.b16 %v164
    %v259 = vunpack.c.h.b16 %v164
    %v260 = vunpack.c.l.b16 %v165
    %v261 = vunpack.c.h.b16 %v165
    %v262 = vpack.c.b16 %v200, %v198
    %v263 = vpack.c.b16 %v201, %v199
    %v264 = vpack.c.b16 %v204, %v202
    %v265 = vpack.c.b16 %v205, %v203
    %v266 = vpack.c.b16 %v208, %v206
    %v267 = vpack.c.b16 %v209, %v207
    %v268 = vpack.c.b16 %v212, %v210
    %v269 = vpack.c.b16 %v213, %v211
    %v270 = vpack.c.b16 %v216, %v214
    %v271 = vpack.c.b16 %v217, %v215
    %v272 = vpack.c.b16 %v220, %v218
    %v273 = vpack.c.b16 %v221, %v219
    %v274 = vpack.c.b16 %v224, %v222
    %v275 = vpack.c.b16 %v225, %v223
    %v276 = vpack.c.b16 %v228, %v226
    %v277 = vpack.c.b16 %v229, %v227
    %v278 = vpack.c.b16 %v232, %v230
    %v279 = vpack.c.b16 %v233, %v231
    %v280 = vpack.c.b16 %v236, %v234
    %v281 = vpack.c.b16 %v237, %v235
    %v282 = vpack.c.b16 %v240, %v238
    %v283 = vpack.c.b16 %v241, %v239
    %v284 = vpack.c.b16 %v244, %v242
    %v285 = vpack.c.b16 %v245, %v243
    %v286 = vpack.c.b16 %v248, %v246
    %v287 = vpack.c.b16 %v249, %v247
    %v288 = vpack.c.b16 %v252, %v250
    %v289 = vpack.c.b16 %v253, %v251
    %v290 = vpack.c.b16 %v256, %v254
    %v291 = vpack.c.b16 %v257, %v255
    %v292 = vpack.c.b16 %v260, %v258
    %v293 = vpack.c.b16 %v261, %v259
    %326 = vmatprep.subr.bf16.mxu0 %v277
    %327 = vmatpush1.bf16.msra.mxu0 %v276
    %328 = vmatprep.subr.bf16.mxu0 %v275
    %329 = vmatpush1.bf16.msra.mxu0 %v274
    %330 = vmatprep.subr.bf16.mxu0 %v273
    %331 = vmatpush1.bf16.msra.mxu0 %v272
    %332 = vmatprep.subr.bf16.mxu0 %v271
    %333 = vmatpush1.bf16.msra.mxu0 %v270
    %334 = vmatprep.subr.bf16.mxu0 %v269
    %335 = vmatpush1.bf16.msra.mxu0 %v268
    %336 = vmatprep.subr.bf16.mxu0 %v267
    %337 = vmatpush1.bf16.msra.mxu0 %v266
    %338 = vmatprep.subr.bf16.mxu0 %v265
    %339 = vmatpush1.bf16.msra.mxu0 %v264
    %340 = vmatprep.subr.bf16.mxu0 %v263
    %341 = vmatpush1.bf16.msra.mxu0 %v262
    %342 = vmatprep.subr.bf16.mxu0 %v293
    %343 = vmatpush2.bf16.msra.mxu0 %v292
    %344 = vmatprep.subr.bf16.mxu0 %v291
    %345 = vmatpush2.bf16.msra.mxu0 %v290
    %346 = vmatprep.subr.bf16.mxu0 %v289
    %347 = vmatpush2.bf16.msra.mxu0 %v288
    %348 = vmatprep.subr.bf16.mxu0 %v287
    %349 = vmatpush2.bf16.msra.mxu0 %v286
    %350 = vmatprep.subr.bf16.mxu0 %v285
    %351 = vmatpush2.bf16.msra.mxu0 %v284
    %352 = vmatprep.subr.bf16.mxu0 %v283
    %353 = vmatpush2.bf16.msra.mxu0 %v282
    %354 = vmatprep.subr.bf16.mxu0 %v281
    %355 = vmatpush2.bf16.msra.mxu0 %v280
    %356 = vmatprep.subr.bf16.mxu0 %v279
    %357 = vmatpush2.bf16.msra.mxu0 %v278
    %358 = vmatprep.mubr.bf16.mxu0 %v117
    %359 = vmatmul.mubr.bf16.gmra.mxu0 %v116
    %v360 = vpop.f32.mrf.mxu0
    %v361 = vadd.f32 0.0, %v360
    %v362 = vpop.f32.mrf.mxu0
    %v363 = vadd.f32 0.0, %v362
    %v364 = vpop.f32.mrf.mxu0
    %v365 = vpop.f32.mrf.mxu0
    %366 = vdwg.mxu0
    %v383 = vunpack.c.l.b16 %v118
    %v384 = vunpack.c.h.b16 %v118
    %v385 = vunpack.c.l.b16 %v119
    %v386 = vunpack.c.h.b16 %v119
    %v387 = vunpack.c.l.b16 %v120
    %v388 = vunpack.c.h.b16 %v120
    %v389 = vunpack.c.l.b16 %v121
    %v390 = vunpack.c.h.b16 %v121
    %v391 = vunpack.c.l.b16 %v122
    %v392 = vunpack.c.h.b16 %v122
    %v393 = vunpack.c.l.b16 %v123
    %v394 = vunpack.c.h.b16 %v123
    %v395 = vunpack.c.l.b16 %v124
    %v396 = vunpack.c.h.b16 %v124
    %v397 = vunpack.c.l.b16 %v125
    %v398 = vunpack.c.h.b16 %v125
    %v399 = vunpack.c.l.b16 %v126
    %v400 = vunpack.c.h.b16 %v126
    %v401 = vunpack.c.l.b16 %v127
    %v402 = vunpack.c.h.b16 %v127
    %v403 = vunpack.c.l.b16 %v128
    %v404 = vunpack.c.h.b16 %v128
    %v405 = vunpack.c.l.b16 %v129
    %v406 = vunpack.c.h.b16 %v129
    %v407 = vunpack.c.l.b16 %v130
    %v408 = vunpack.c.h.b16 %v130
    %v409 = vunpack.c.l.b16 %v131
    %v410 = vunpack.c.h.b16 %v131
    %v411 = vunpack.c.l.b16 %v132
    %v412 = vunpack.c.h.b16 %v132
    %v413 = vunpack.c.l.b16 %v133
    %v414 = vunpack.c.h.b16 %v133
    %v415 = vpack.c.b16 %v385, %v383
    %v416 = vpack.c.b16 %v386, %v384
    %v417 = vpack.c.b16 %v389, %v387
    %v418 = vpack.c.b16 %v390, %v388
    %v419 = vpack.c.b16 %v393, %v391
    %v420 = vpack.c.b16 %v394, %v392
    %v421 = vpack.c.b16 %v397, %v395
    %v422 = vpack.c.b16 %v398, %v396
    %v423 = vpack.c.b16 %v401, %v399
    %v424 = vpack.c.b16 %v402, %v400
    %v425 = vpack.c.b16 %v405, %v403
    %v426 = vpack.c.b16 %v406, %v404
    %v427 = vpack.c.b16 %v409, %v407
    %v428 = vpack.c.b16 %v410, %v408
    %v429 = vpack.c.b16 %v413, %v411
    %v430 = vpack.c.b16 %v414, %v412
    %447 = vmatprep.subr.bf16.mxu0 %v430
    %448 = vmatpush1.bf16.msra.mxu0 %v429
    %449 = vmatprep.subr.bf16.mxu0 %v428
    %450 = vmatpush1.bf16.msra.mxu0 %v427
    %451 = vmatprep.subr.bf16.mxu0 %v426
    %452 = vmatpush1.bf16.msra.mxu0 %v425
    %453 = vmatprep.subr.bf16.mxu0 %v424
    %454 = vmatpush1.bf16.msra.mxu0 %v423
    %455 = vmatprep.subr.bf16.mxu0 %v422
    %456 = vmatpush1.bf16.msra.mxu0 %v421
    %457 = vmatprep.subr.bf16.mxu0 %v420
    %458 = vmatpush1.bf16.msra.mxu0 %v419
    %459 = vmatprep.subr.bf16.mxu0 %v418
    %460 = vmatpush1.bf16.msra.mxu0 %v417
    %461 = vmatprep.subr.bf16.mxu0 %v416
    %462 = vmatpush1.bf16.msra.mxu0 %v415
    %463 = vmatprep.subr.bf16.mxu0 0
    %464 = vmatpush2.bf16.msra.mxu0 0
    %465 = vmatprep.subr.bf16.mxu0 0
    %466 = vmatpush2.bf16.msra.mxu0 0
    %467 = vmatprep.subr.bf16.mxu0 0
    %468 = vmatpush2.bf16.msra.mxu0 0
    %469 = vmatprep.subr.bf16.mxu0 0
    %470 = vmatpush2.bf16.msra.mxu0 0
    %471 = vmatprep.subr.bf16.mxu0 0
    %472 = vmatpush2.bf16.msra.mxu0 0
    %473 = vmatprep.subr.bf16.mxu0 0
    %474 = vmatpush2.bf16.msra.mxu0 0
    %475 = vmatprep.subr.bf16.mxu0 0
    %476 = vmatpush2.bf16.msra.mxu0 0
    %477 = vmatprep.subr.bf16.mxu0 0
    %478 = vmatpush2.bf16.msra.mxu0 0
    %479 = vmatprep.mubr.bf16.mxu0 0
    %480 = vmatmul.mubr.bf16.gmra.mxu0 %v113
    %v481 = vpop.f32.mrf.mxu0
    %v482 = vadd.f32 %v361, %v481
    %v483 = vpop.f32.mrf.mxu0
    %v484 = vadd.f32 %v363, %v483
    %v485 = vpop.f32.mrf.mxu0
    %v486 = vpop.f32.mrf.mxu0
    %487 = vdwg.mxu0
    %v488 = vld [vmem:[%s4] sm:$0x3]
    %v490 = vlaneseq
    %v491 = vshrl.u32 %v490, 7
    %v492 = vsub.s32 0, %v491
    %v493 = vrot.slane %v488, %v492
    %v494 = vlaneseq
    %v495 = vshrl.u32 %v494, 7
    %v496 = vsub.s32 1, %v495
    %v497 = vrot.slane %v488, %v496
    %v500 = vadd.f32 %v482, %v493
    %v501 = vadd.f32 %v484, %v497
    %v502 = vmax.f32 %v500, 0.0
    %v503 = vmax.f32 %v501, 0.0
    %v504 = vpack.c.bf16 %v502, %v502
    %v505 = vpack.c.bf16 %v503, %v503
    %v506 = vld [vmem:[#allocation10] sm:$0xff]
    %v507 = vld [vmem:[#allocation10 + $0x8] sm:$0xff]
    %v508 = vld [vmem:[#allocation10 + $0x10] sm:$0xff]
    %v509 = vld [vmem:[#allocation10 + $0x18] sm:$0xff]
    %v510 = vld [vmem:[#allocation10 + $0x20] sm:$0xff]
    %v511 = vld [vmem:[#allocation10 + $0x28] sm:$0xff]
    %v512 = vld [vmem:[#allocation10 + $0x30] sm:$0xff]
    %v513 = vld [vmem:[#allocation10 + $0x38] sm:$0xff]
    %v514 = vld [vmem:[#allocation10 + $0x40] sm:$0xff]
    %v515 = vld [vmem:[#allocation10 + $0x48] sm:$0xff]
    %v516 = vld [vmem:[#allocation10 + $0x50] sm:$0xff]
    %v517 = vld [vmem:[#allocation10 + $0x58] sm:$0xff]
    %v518 = vld [vmem:[#allocation10 + $0x60] sm:$0xff]
    %v519 = vld [vmem:[#allocation10 + $0x68] sm:$0xff]
    %v520 = vld [vmem:[#allocation10 + $0x70] sm:$0xff]
    %v521 = vld [vmem:[#allocation10 + $0x78] sm:$0xff]
    %v522 = vld [vmem:[#allocation10 + $0x80] sm:$0xff]
    %v523 = vld [vmem:[#allocation10 + $0x88] sm:$0xff]
    %v524 = vld [vmem:[#allocation10 + $0x90] sm:$0xff]
    %v525 = vld [vmem:[#allocation10 + $0x98] sm:$0xff]
    %v526 = vld [vmem:[#allocation10 + $0xa0] sm:$0xff]
    %v527 = vld [vmem:[#allocation10 + $0xa8] sm:$0xff]
    %v528 = vld [vmem:[#allocation10 + $0xb0] sm:$0xff]
    %v529 = vld [vmem:[#allocation10 + $0xb8] sm:$0xff]
    %v530 = vld [vmem:[#allocation10 + $0xc0] sm:$0xff]
    %v531 = vld [vmem:[#allocation10 + $0xc8] sm:$0xff]
    %v532 = vld [vmem:[#allocation10 + $0xd0] sm:$0xff]
    %v533 = vld [vmem:[#allocation10 + $0xd8] sm:$0xff]
    %v534 = vld [vmem:[#allocation10 + $0xe0] sm:$0xff]
    %v535 = vld [vmem:[#allocation10 + $0xe8] sm:$0xff]
    %v536 = vld [vmem:[#allocation10 + $0xf0] sm:$0xff]
    %v537 = vld [vmem:[#allocation10 + $0xf8] sm:$0xff]
    %v538 = vld [vmem:[%s6] sm:$0x3]
    %v540 = vlaneseq
    %v541 = vshrl.u32 %v540, 7
    %v542 = vsub.s32 0, %v541
    %v543 = vrot.slane %v538, %v542
    %v544 = vlaneseq
    %v545 = vshrl.u32 %v544, 7
    %v546 = vsub.s32 1, %v545
    %v547 = vrot.slane %v538, %v546
    %v582 = vunpack.c.l.b16 %v506
    %v583 = vunpack.c.h.b16 %v506
    %v584 = vunpack.c.l.b16 %v507
    %v585 = vunpack.c.h.b16 %v507
    %v586 = vunpack.c.l.b16 %v508
    %v587 = vunpack.c.h.b16 %v508
    %v588 = vunpack.c.l.b16 %v509
    %v589 = vunpack.c.h.b16 %v509
    %v590 = vunpack.c.l.b16 %v510
    %v591 = vunpack.c.h.b16 %v510
    %v592 = vunpack.c.l.b16 %v511
    %v593 = vunpack.c.h.b16 %v511
    %v594 = vunpack.c.l.b16 %v512
    %v595 = vunpack.c.h.b16 %v512
    %v596 = vunpack.c.l.b16 %v513
    %v597 = vunpack.c.h.b16 %v513
    %v598 = vunpack.c.l.b16 %v514
    %v599 = vunpack.c.h.b16 %v514
    %v600 = vunpack.c.l.b16 %v515
    %v601 = vunpack.c.h.b16 %v515
    %v602 = vunpack.c.l.b16 %v516
    %v603 = vunpack.c.h.b16 %v516
    %v604 = vunpack.c.l.b16 %v517
    %v605 = vunpack.c.h.b16 %v517
    %v606 = vunpack.c.l.b16 %v518
    %v607 = vunpack.c.h.b16 %v518
    %v608 = vunpack.c.l.b16 %v519
    %v609 = vunpack.c.h.b16 %v519
    %v610 = vunpack.c.l.b16 %v520
    %v611 = vunpack.c.h.b16 %v520
    %v612 = vunpack.c.l.b16 %v521
    %v613 = vunpack.c.h.b16 %v521
    %v614 = vunpack.c.l.b16 %v522
    %v615 = vunpack.c.h.b16 %v522
    %v616 = vunpack.c.l.b16 %v523
    %v617 = vunpack.c.h.b16 %v523
    %v618 = vunpack.c.l.b16 %v524
    %v619 = vunpack.c.h.b16 %v524
    %v620 = vunpack.c.l.b16 %v525
    %v621 = vunpack.c.h.b16 %v525
    %v622 = vunpack.c.l.b16 %v526
    %v623 = vunpack.c.h.b16 %v526
    %v624 = vunpack.c.l.b16 %v527
    %v625 = vunpack.c.h.b16 %v527
    %v626 = vunpack.c.l.b16 %v528
    %v627 = vunpack.c.h.b16 %v528
    %v628 = vunpack.c.l.b16 %v529
    %v629 = vunpack.c.h.b16 %v529
    %v630 = vunpack.c.l.b16 %v530
    %v631 = vunpack.c.h.b16 %v530
    %v632 = vunpack.c.l.b16 %v531
    %v633 = vunpack.c.h.b16 %v531
    %v634 = vunpack.c.l.b16 %v532
    %v635 = vunpack.c.h.b16 %v532
    %v636 = vunpack.c.l.b16 %v533
    %v637 = vunpack.c.h.b16 %v533
    %v638 = vunpack.c.l.b16 %v534
    %v639 = vunpack.c.h.b16 %v534
    %v640 = vunpack.c.l.b16 %v535
    %v641 = vunpack.c.h.b16 %v535
    %v642 = vunpack.c.l.b16 %v536
    %v643 = vunpack.c.h.b16 %v536
    %v644 = vunpack.c.l.b16 %v537
    %v645 = vunpack.c.h.b16 %v537
    %v646 = vpack.c.b16 %v584, %v582
    %v647 = vpack.c.b16 %v585, %v583
    %v648 = vpack.c.b16 %v588, %v586
    %v649 = vpack.c.b16 %v589, %v587
    %v650 = vpack.c.b16 %v592, %v590
    %v651 = vpack.c.b16 %v593, %v591
    %v652 = vpack.c.b16 %v596, %v594
    %v653 = vpack.c.b16 %v597, %v595
    %v654 = vpack.c.b16 %v600, %v598
    %v655 = vpack.c.b16 %v601, %v599
    %v656 = vpack.c.b16 %v604, %v602
    %v657 = vpack.c.b16 %v605, %v603
    %v658 = vpack.c.b16 %v608, %v606
    %v659 = vpack.c.b16 %v609, %v607
    %v660 = vpack.c.b16 %v612, %v610
    %v661 = vpack.c.b16 %v613, %v611
    %v662 = vpack.c.b16 %v616, %v614
    %v663 = vpack.c.b16 %v617, %v615
    %v664 = vpack.c.b16 %v620, %v618
    %v665 = vpack.c.b16 %v621, %v619
    %v666 = vpack.c.b16 %v624, %v622
    %v667 = vpack.c.b16 %v625, %v623
    %v668 = vpack.c.b16 %v628, %v626
    %v669 = vpack.c.b16 %v629, %v627
    %v670 = vpack.c.b16 %v632, %v630
    %v671 = vpack.c.b16 %v633, %v631
    %v672 = vpack.c.b16 %v636, %v634
    %v673 = vpack.c.b16 %v637, %v635
    %v674 = vpack.c.b16 %v640, %v638
    %v675 = vpack.c.b16 %v641, %v639
    %v676 = vpack.c.b16 %v644, %v642
    %v677 = vpack.c.b16 %v645, %v643
    %710 = vmatprep.subr.bf16.mxu0 %v661
    %711 = vmatpush1.bf16.msra.mxu0 %v660
    %712 = vmatprep.subr.bf16.mxu0 %v659
    %713 = vmatpush1.bf16.msra.mxu0 %v658
    %714 = vmatprep.subr.bf16.mxu0 %v657
    %715 = vmatpush1.bf16.msra.mxu0 %v656
    %716 = vmatprep.subr.bf16.mxu0 %v655
    %717 = vmatpush1.bf16.msra.mxu0 %v654
    %718 = vmatprep.subr.bf16.mxu0 %v653
    %719 = vmatpush1.bf16.msra.mxu0 %v652
    %720 = vmatprep.subr.bf16.mxu0 %v651
    %721 = vmatpush1.bf16.msra.mxu0 %v650
    %722 = vmatprep.subr.bf16.mxu0 %v649
    %723 = vmatpush1.bf16.msra.mxu0 %v648
    %724 = vmatprep.subr.bf16.mxu0 %v647
    %725 = vmatpush1.bf16.msra.mxu0 %v646
    %726 = vmatprep.subr.bf16.mxu0 %v677
    %727 = vmatpush2.bf16.msra.mxu0 %v676
    %728 = vmatprep.subr.bf16.mxu0 %v675
    %729 = vmatpush2.bf16.msra.mxu0 %v674
    %730 = vmatprep.subr.bf16.mxu0 %v673
    %731 = vmatpush2.bf16.msra.mxu0 %v672
    %732 = vmatprep.subr.bf16.mxu0 %v671
    %733 = vmatpush2.bf16.msra.mxu0 %v670
    %734 = vmatprep.subr.bf16.mxu0 %v669
    %735 = vmatpush2.bf16.msra.mxu0 %v668
    %736 = vmatprep.subr.bf16.mxu0 %v667
    %737 = vmatpush2.bf16.msra.mxu0 %v666
    %738 = vmatprep.subr.bf16.mxu0 %v665
    %739 = vmatpush2.bf16.msra.mxu0 %v664
    %740 = vmatprep.subr.bf16.mxu0 %v663
    %741 = vmatpush2.bf16.msra.mxu0 %v662
    %742 = vmatprep.mubr.bf16.mxu0 %v505
    %743 = vmatmul.mubr.bf16.gmra.mxu0 %v504
    %v744 = vpop.f32.mrf.mxu0
    %v745 = vadd.f32 %v543, %v744
    %v746 = vpop.f32.mrf.mxu0
    %v747 = vadd.f32 %v547, %v746
    %v748 = vpop.f32.mrf.mxu0
    %v749 = vpop.f32.mrf.mxu0
    %750 = vdwg.mxu0
    %v751 = vmax.f32 %v745, 0.0
    %v752 = vmax.f32 %v747, 0.0
    %v753 = vpack.c.bf16 %v751, %v751
    %v754 = vpack.c.bf16 %v752, %v752
    %v755 = vld [vmem:[#allocation11] sm:$0xf]
    %v756 = vld [vmem:[#allocation11 + $0x4] sm:$0xf]
    %v757 = vld [vmem:[#allocation11 + $0x8] sm:$0xf]
    %v758 = vld [vmem:[#allocation11 + $0xc] sm:$0xf]
    %v759 = vld [vmem:[#allocation11 + $0x10] sm:$0xf]
    %v760 = vld [vmem:[#allocation11 + $0x14] sm:$0xf]
    %v761 = vld [vmem:[#allocation11 + $0x18] sm:$0xf]
    %v762 = vld [vmem:[#allocation11 + $0x1c] sm:$0xf]
    %v763 = vld [vmem:[#allocation11 + $0x20] sm:$0xf]
    %v764 = vld [vmem:[#allocation11 + $0x24] sm:$0xf]
    %v765 = vld [vmem:[#allocation11 + $0x28] sm:$0xf]
    %v766 = vld [vmem:[#allocation11 + $0x2c] sm:$0xf]
    %v767 = vld [vmem:[#allocation11 + $0x30] sm:$0xf]
    %v768 = vld [vmem:[#allocation11 + $0x34] sm:$0xf]
    %v769 = vld [vmem:[#allocation11 + $0x38] sm:$0xf]
    %v770 = vld [vmem:[#allocation11 + $0x3c] sm:$0xf]
    %v771 = vld [vmem:[#allocation11 + $0x40] sm:$0xf]
    %v772 = vld [vmem:[#allocation11 + $0x44] sm:$0xf]
    %v773 = vld [vmem:[#allocation11 + $0x48] sm:$0xf]
    %v774 = vld [vmem:[#allocation11 + $0x4c] sm:$0xf]
    %v775 = vld [vmem:[#allocation11 + $0x50] sm:$0xf]
    %v776 = vld [vmem:[#allocation11 + $0x54] sm:$0xf]
    %v777 = vld [vmem:[#allocation11 + $0x58] sm:$0xf]
    %v778 = vld [vmem:[#allocation11 + $0x5c] sm:$0xf]
    %v779 = vld [vmem:[#allocation11 + $0x60] sm:$0xf]
    %v780 = vld [vmem:[#allocation11 + $0x64] sm:$0xf]
    %v781 = vld [vmem:[#allocation11 + $0x68] sm:$0xf]
    %v782 = vld [vmem:[#allocation11 + $0x6c] sm:$0xf]
    %v783 = vld [vmem:[#allocation11 + $0x70] sm:$0xf]
    %v784 = vld [vmem:[#allocation11 + $0x74] sm:$0xf]
    %v785 = vld [vmem:[#allocation11 + $0x78] sm:$0xf]
    %v786 = vld [vmem:[#allocation11 + $0x7c] sm:$0xf]
    %v787 = vld [vmem:[%s8] sm:$0x1]
    %v789 = vlaneseq
    %v790 = vshrl.u32 %v789, 7
    %v791 = vsub.s32 0, %v790
    %v792 = vrot.slane %v787, %v791
    %v826 = vunpack.c.l.b16 %v755
    %v827 = vunpack.c.l.b16 %v756
    %v828 = vunpack.c.l.b16 %v757
    %v829 = vunpack.c.l.b16 %v758
    %v830 = vunpack.c.l.b16 %v759
    %v831 = vunpack.c.l.b16 %v760
    %v832 = vunpack.c.l.b16 %v761
    %v833 = vunpack.c.l.b16 %v762
    %v834 = vunpack.c.l.b16 %v763
    %v835 = vunpack.c.l.b16 %v764
    %v836 = vunpack.c.l.b16 %v765
    %v837 = vunpack.c.l.b16 %v766
    %v838 = vunpack.c.l.b16 %v767
    %v839 = vunpack.c.l.b16 %v768
    %v840 = vunpack.c.l.b16 %v769
    %v841 = vunpack.c.l.b16 %v770
    %v842 = vunpack.c.l.b16 %v771
    %v843 = vunpack.c.l.b16 %v772
    %v844 = vunpack.c.l.b16 %v773
    %v845 = vunpack.c.l.b16 %v774
    %v846 = vunpack.c.l.b16 %v775
    %v847 = vunpack.c.l.b16 %v776
    %v848 = vunpack.c.l.b16 %v777
    %v849 = vunpack.c.l.b16 %v778
    %v850 = vunpack.c.l.b16 %v779
    %v851 = vunpack.c.l.b16 %v780
    %v852 = vunpack.c.l.b16 %v781
    %v853 = vunpack.c.l.b16 %v782
    %v854 = vunpack.c.l.b16 %v783
    %v855 = vunpack.c.l.b16 %v784
    %v856 = vunpack.c.l.b16 %v785
    %v857 = vunpack.c.l.b16 %v786
    %v858 = vpack.c.b16 %v827, %v826
    %v859 = vpack.c.b16 %v829, %v828
    %v860 = vpack.c.b16 %v831, %v830
    %v861 = vpack.c.b16 %v833, %v832
    %v862 = vpack.c.b16 %v835, %v834
    %v863 = vpack.c.b16 %v837, %v836
    %v864 = vpack.c.b16 %v839, %v838
    %v865 = vpack.c.b16 %v841, %v840
    %v866 = vpack.c.b16 %v843, %v842
    %v867 = vpack.c.b16 %v845, %v844
    %v868 = vpack.c.b16 %v847, %v846
    %v869 = vpack.c.b16 %v849, %v848
    %v870 = vpack.c.b16 %v851, %v850
    %v871 = vpack.c.b16 %v853, %v852
    %v872 = vpack.c.b16 %v855, %v854
    %v873 = vpack.c.b16 %v857, %v856
    %890 = vmatprep.subr.bf16.mxu0 0
    %891 = vmatpush1.bf16.msra.mxu0 %v865
    %892 = vmatprep.subr.bf16.mxu0 0
    %893 = vmatpush1.bf16.msra.mxu0 %v864
    %894 = vmatprep.subr.bf16.mxu0 0
    %895 = vmatpush1.bf16.msra.mxu0 %v863
    %896 = vmatprep.subr.bf16.mxu0 0
    %897 = vmatpush1.bf16.msra.mxu0 %v862
    %898 = vmatprep.subr.bf16.mxu0 0
    %899 = vmatpush1.bf16.msra.mxu0 %v861
    %900 = vmatprep.subr.bf16.mxu0 0
    %901 = vmatpush1.bf16.msra.mxu0 %v860
    %902 = vmatprep.subr.bf16.mxu0 0
    %903 = vmatpush1.bf16.msra.mxu0 %v859
    %904 = vmatprep.subr.bf16.mxu0 0
    %905 = vmatpush1.bf16.msra.mxu0 %v858
    %906 = vmatprep.subr.bf16.mxu0 0
    %907 = vmatpush2.bf16.msra.mxu0 %v873
    %908 = vmatprep.subr.bf16.mxu0 0
    %909 = vmatpush2.bf16.msra.mxu0 %v872
    %910 = vmatprep.subr.bf16.mxu0 0
    %911 = vmatpush2.bf16.msra.mxu0 %v871
    %912 = vmatprep.subr.bf16.mxu0 0
    %913 = vmatpush2.bf16.msra.mxu0 %v870
    %914 = vmatprep.subr.bf16.mxu0 0
    %915 = vmatpush2.bf16.msra.mxu0 %v869
    %916 = vmatprep.subr.bf16.mxu0 0
    %917 = vmatpush2.bf16.msra.mxu0 %v868
    %918 = vmatprep.subr.bf16.mxu0 0
    %919 = vmatpush2.bf16.msra.mxu0 %v867
    %920 = vmatprep.subr.bf16.mxu0 0
    %921 = vmatpush2.bf16.msra.mxu0 %v866
    %922 = vmatprep.mubr.bf16.mxu0 %v754
    %923 = vmatmul.mubr.bf16.gmra.mxu0 %v753
    %v924 = vpop.f32.mrf.mxu0
    %v925 = vadd.f32 %v792, %v924
    %v926 = vpop.f32.mrf.mxu0
    %v927 = vpop.f32.mrf.mxu0
    %v928 = vpop.f32.mrf.mxu0
    %929 = vdwg.mxu0
    %930 = vst [vmem:[#allocation13] sm:$0xff] %v925
    // Predicated region
    $region62: #{tpu_custom_call.1} parent=1 // pred_check
      _
    $region63: #{tpu_custom_call.1} parent=1 // pred_check_branch
      %932 = sbr.rel (0) target = $region65
    $region64: #{tpu_custom_call.1} parent=1 // pred_region
      %s934 = ssub.s32 128, 128
      %935 = vsyncadd [#allocation4], %s934
      %s937 = sshll.u32 [#allocation13], 4
      %s938 = int_to_ptr.vmem [resolvable:$true] %s937
      %940 = dma.vmem_to_hbm [thread:$0]  %s938, 128, %s9, [#allocation4]
    $region65: #{tpu_custom_call.1} parent=1 // pred_fallthru
      _
    // Predicated region
    $region66: #{tpu_custom_call.1} parent=1 // pred_check
      _
    $region67: #{tpu_custom_call.1} parent=1 // pred_check_branch
      %942 = sbr.rel (0) target = $region69
    $region68: #{tpu_custom_call.1} parent=1 // pred_region
      %943 = dma.done [#allocation4], 128
    $region69: #{tpu_custom_call.1} parent=1 // pred_fallthru
      _
    %944 = vsyncpa [#allocation3], 1
    %945 = vsyncpa [#allocation6], 1
    %946 = vsyncpa [#allocation9], 1
    %947 = vsyncpa [#allocation12], 1
    %948 = vsyncpa [#allocation4], 1

</llo_original>
